<compile_context>
chip_gen: v5e
topology: v5e:2x2
jax: 0.10.0
libtpu: 0.0.40
codegen_flags: <defaults>
</compile_context>

<pallas_src>
import functools

import jax
import jax.numpy as jnp
from jax import lax
from jax.experimental import pallas as pl
from jax.experimental.pallas import tpu as pltpu

# ---- module hyper-parameters (DependencyAwareLoss.__init__ defaults) --------
RELEVANCE_W = 1.0
CONTRASTIVE_W = 0.1
RANKING_W = 0.3
MARGIN_W = 0.1
CONTRASTIVE_TEMP = 0.07
RANKING_TEMP = 1.0
MARGIN = 0.5
DEPENDENCY_WEIGHTS = {
    "continuation": 1.2, "pronoun_reference": 1.5, "clarification": 1.3,
    "topic_reference": 1.0, "agreement": 1.1, "follow_up": 1.1,
    "example_request": 1.0, "none": 0.8,
}


def _xlogx(t):
    # torch.xlogy(t, t) semantics: 0 when t == 0 (single select + single log)
    return jnp.where(t > 0, t * jnp.log(jnp.maximum(t, 1e-30)), 0.0)


# ---------------------------- fused Pallas kernel -----------------------------
def _fused_loss_kernel(embr_ref, embc_ref, labr_ref, labc_ref,
                       att_ref, tgt_ref, w_ref, scores_ref, rlab_ref,
                       out_ref,
                       qn_scr, m_scr, l_scr, s_scr, p_scr, csum_scr,
                       *, n_msgs):
    f32 = jnp.float32
    i = pl.program_id(0)            # anchor (row) block      -- outer axis
    j = pl.program_id(1)            # candidate (column) block -- inner (reduction) axis
    n_row_blk = pl.num_programs(0)
    n_col_blk = pl.num_programs(1)
    tr = embr_ref.shape[0]
    tc = embc_ref.shape[0]

    # =========== contrastive InfoNCE: flash-style online logsumexp ==========
    @pl.when(jnp.logical_and(i == 0, j == 0))
    def _init_global():
        csum_scr[...] = jnp.zeros(csum_scr.shape, f32)

    @pl.when(j == 0)
    def _init_row_block():
        m_scr[...] = jnp.full(m_scr.shape, -1e30, f32)
        l_scr[...] = jnp.zeros(l_scr.shape, f32)
        s_scr[...] = jnp.zeros(s_scr.shape, f32)
        p_scr[...] = jnp.zeros(p_scr.shape, f32)
        er = embr_ref[...].astype(f32)
        # L2-normalize the anchor tile once per row block; cache in bf16 for MXU.
        qn_scr[...] = (er * lax.rsqrt(jnp.sum(er * er, axis=-1, keepdims=True)
                                      + 1e-24)).astype(qn_scr.dtype)

    ec = embc_ref[...].astype(f32)
    kn = (ec * lax.rsqrt(jnp.sum(ec * ec, axis=-1, keepdims=True) + 1e-24)
          ).astype(jnp.bfloat16)
    # bf16 MXU inputs, f32 accumulation (keeps loss numerics).
    # TODO(synk): at very large D, pre-transpose the candidate tile so the MXU
    # RHS arrives in [K, N] layout instead of being re-transposed per tile.
    sim = lax.dot_general(qn_scr[...], kn, (((1,), (1,)), ((), ())),
                          preferred_element_type=f32) * (1.0 / CONTRASTIVE_TEMP)

    row_g = lax.broadcasted_iota(jnp.int32, (tr, tc), 0) + i * tr
    col_g = lax.broadcasted_iota(jnp.int32, (tr, tc), 1) + j * tc
    pos = jnp.where(jnp.logical_and(labr_ref[...] == labc_ref[...],
                                    row_g != col_g), 1.0, 0.0).astype(f32)

    m_prev = m_scr[...]
    m_new = jnp.maximum(m_prev, jnp.max(sim, axis=-1, keepdims=True))
    l_scr[...] = (l_scr[...] * jnp.exp(m_prev - m_new)
                  + jnp.sum(jnp.exp(sim - m_new), axis=-1, keepdims=True))
    s_scr[...] += jnp.sum(pos * sim, axis=-1, keepdims=True)
    p_scr[...] += jnp.sum(pos, axis=-1, keepdims=True)
    m_scr[...] = m_new

    @pl.when(j == n_col_blk - 1)
    def _finish_row_block():
        log_den = jnp.log(l_scr[...] + 1e-8)          # matches torch: log(sum(exp)+1e-8)
        p = p_scr[...]
        # sum_j pos*(sim - m - log_den) / clamp(num_pos, 1)
        mean_lpp = (s_scr[...] - p * (m_scr[...] + log_den)) / jnp.maximum(p, 1.0)
        csum_scr[...] += jnp.sum(mean_lpp, axis=0, keepdims=True)

    # ======= remaining losses + output write: only at the final grid step ====
    @pl.when(jnp.logical_and(i == n_row_blk - 1, j == n_col_blk - 1))
    def _finalize():
        con_loss = csum_scr[...] * (-CONTRASTIVE_W / n_msgs)          # (1, 1)

        # ---- relevance: KL(target || att) per row, dependency-weighted, mean
        att = att_ref[...].astype(f32)
        tgt = tgt_ref[...].astype(f32)
        b = att.shape[0]
        kl = _xlogx(tgt) - tgt * jnp.log(att + 1e-10)
        per_row = jnp.sum(kl, axis=-1, keepdims=True) * w_ref[...].astype(f32)
        rel_loss = jnp.sum(per_row, axis=0, keepdims=True) * (RELEVANCE_W / b)

        # ---- ranking: ListNet KL(target_probs || softmax(scores)), batchmean
        labels = rlab_ref[...].astype(f32)
        s = scores_ref[...].astype(f32) * (1.0 / RANKING_TEMP)
        shifted = s - jnp.max(s, axis=-1, keepdims=True)
        log_pred = shifted - jnp.log(jnp.sum(jnp.exp(shifted), axis=-1, keepdims=True))
        rel_sum = jnp.maximum(jnp.sum(labels, axis=-1, keepdims=True), 1e-8)
        tprob = labels / rel_sum                                       # exact division
        kl_r = _xlogx(tprob) - tprob * log_pred
        rank_loss = jnp.sum(jnp.sum(kl_r, axis=-1, keepdims=True),
                            axis=0, keepdims=True) * (RANKING_W / labels.shape[0])

        # ---- margin ranking: relu(margin - (s_rel - s_irrel)) over valid pairs
        s_raw = scores_ref[...].astype(f32)
        relm = (labels > 0).astype(f32)
        irrm = (labels == 0).astype(f32)
        n_irr = jnp.sum(irrm, axis=-1, keepdims=True)                  # hoisted
        bsz, n_items = s_raw.shape
        lsum = jnp.zeros((bsz, 1), f32)
        vsum = jnp.zeros((bsz, 1), f32)
        if n_items <= 64:
            # Trace-time loop: static column slices (cheap lane selects).
            for c in range(n_items):
                s_c = s_raw[:, c:c + 1]                                # [B, 1]
                r_c = relm[:, c:c + 1]                                 # [B, 1]
                hinge = jnp.maximum(MARGIN - (s_c - s_raw), 0.0)       # [B, I]
                lsum = lsum + r_c * jnp.sum(hinge * irrm, axis=-1, keepdims=True)
                vsum = vsum + r_c * n_irr
        else:
            # Large I: capped unroll, dynamic column slices straight off the refs.
            def mbody(c, carry):
                ls, vs = carry
                s_c = scores_ref[:, pl.ds(c, 1)].astype(f32)
                r_c = (rlab_ref[:, pl.ds(c, 1)].astype(f32) > 0).astype(f32)
                hinge = jnp.maximum(MARGIN - (s_c - s_raw), 0.0)
                return (ls + r_c * jnp.sum(hinge * irrm, axis=-1, keepdims=True),
                        vs + r_c * n_irr)
            lsum, vsum = lax.fori_loop(0, n_items, mbody, (lsum, vsum), unroll=8)
        lsum_t = jnp.sum(lsum, axis=0, keepdims=True)                  # (1, 1)
        vsum_t = jnp.sum(vsum, axis=0, keepdims=True)
        margin_loss = jnp.where(vsum_t > 0,
                                lsum_t / jnp.maximum(vsum_t, 1.0), 0.0) * MARGIN_W

        total = rel_loss + con_loss + rank_loss + margin_loss

        # ---- single lane-dense output row: [rel, con, rank, margin, total, 0...]
        lane = lax.broadcasted_iota(jnp.int32, (1, 128), 1)
        out_ref[...] = (jnp.where(lane == 0, rel_loss, 0.0)
                        + jnp.where(lane == 1, con_loss, 0.0)
                        + jnp.where(lane == 2, rank_loss, 0.0)
                        + jnp.where(lane == 3, margin_loss, 0.0)
                        + jnp.where(lane == 4, total, 0.0))


# ------------------------------ wrapper -------------------------------------
def _contrastive_block(n):
    """Row/column block size for tiled InfoNCE.  Sized so double-buffered
    embedding tiles + the [blk, blk] f32 similarity intermediates stay well
    under v7x's 64 MiB physical VMEM (v5e/v6e have 128 MiB headroom)."""
    if n <= 256:
        return n
    for c in (256, 128):
        if n % c == 0:
            return c
    # TODO(synk): pad N (or use pl.BoundedSlice) for ragged block tiling.
    return n


def dependency_aware_loss(predictions, targets, message_embeddings,
                          dependency_types=None):
    """JAX/Pallas equivalent of DependencyAwareLoss.forward (weighted losses)."""
    att = predictions["attention_weights"]
    tgt = targets["target_weights"]
    scores = predictions["relevance_scores"]
    rel_labels = targets["relevance_labels"]
    dep_labels = targets["dependency_labels"].astype(jnp.int32)
    b = att.shape[0]
    n, d = message_embeddings.shape

    if dependency_types is not None:
        # TODO(synk): string->weight dict lookup has no Pallas equivalent; Python glue.
        w = jnp.asarray([DEPENDENCY_WEIGHTS.get(dt, 1.0) for dt in dependency_types],
                        dtype=jnp.float32)
    else:
        w = jnp.ones((b,), dtype=jnp.float32)

    tr = _contrastive_block(n)
    tc = _contrastive_block(n)
    grid = (n // tr, n // tc)        # column (reduction) axis iterates fastest

    kernel = functools.partial(_fused_loss_kernel, n_msgs=n)

    grid_spec = pltpu.PrefetchScalarGridSpec(
        num_scalar_prefetch=0,
        grid=grid,
        in_specs=[
            pl.BlockSpec((tr, d), lambda i, j: (i, 0)),    # emb, anchor row tiles
            pl.BlockSpec((tc, d), lambda i, j: (j, 0)),    # emb, candidate col tiles
            pl.BlockSpec((tr, 1), lambda i, j: (i, 0)),    # dep labels, row view
            pl.BlockSpec((1, tc), lambda i, j: (0, j)),    # dep labels, col view
            pl.BlockSpec((b, att.shape[1]), lambda i, j: (0, 0)),        # attention
            pl.BlockSpec((b, tgt.shape[1]), lambda i, j: (0, 0)),        # targets
            pl.BlockSpec((b, 1), lambda i, j: (0, 0)),                   # dep weights
            pl.BlockSpec((b, scores.shape[1]), lambda i, j: (0, 0)),     # scores
            pl.BlockSpec((b, rel_labels.shape[1]), lambda i, j: (0, 0)), # rel labels
        ],
        out_specs=pl.BlockSpec((1, 128), lambda i, j: (0, 0)),
        scratch_shapes=[
            pltpu.VMEM((tr, d), jnp.bfloat16),   # cached normalized anchor tile
            pltpu.VMEM((tr, 1), jnp.float32),    # running max
            pltpu.VMEM((tr, 1), jnp.float32),    # running sum-exp
            pltpu.VMEM((tr, 1), jnp.float32),    # sum pos*sim
            pltpu.VMEM((tr, 1), jnp.float32),    # num positives
            pltpu.VMEM((1, 1), jnp.float32),     # global contrastive accumulator
        ],
    )

    row = pl.pallas_call(
        kernel,
        out_shape=jax.ShapeDtypeStruct((1, 128), jnp.float32),
        grid_spec=grid_spec,
        compiler_params=pltpu.CompilerParams(
            # Both axes are reductions into scratch accumulators.
            # TODO(synk): v7x megacore variant: row axis "parallel" + per-core
            # partial contrastive sums reduced outside the kernel.
            dimension_semantics=("arbitrary", "arbitrary"),
            vmem_limit_bytes=48 * 1024 * 1024,   # safe headroom on v7x (64 MiB phys)
        ),
    )(message_embeddings, message_embeddings,
      dep_labels.reshape(n, 1), dep_labels.reshape(1, n),
      att, tgt, w.reshape(b, 1), scores, rel_labels)[0]

    return {"relevance": row[0], "contrastive": row[1], "ranking": row[2],
            "margin": row[3], "total": row[4]}


# -------------------------------- main ---------------------------------------
if __name__ == "__main__":
    key = jax.random.PRNGKey(0)
    k1, k2, k3, k4, k5, k6 = jax.random.split(key, 6)

    B, C = 8, 16      # batch, num_context
    N, D = 8, 32      # num messages, embedding dim
    I = 16            # num ranked items

    attention_weights = jax.nn.softmax(jax.random.normal(k1, (B, C)), axis=-1)
    target_weights = jax.nn.softmax(jax.random.normal(k2, (B, C)), axis=-1)
    message_embeddings = jax.random.normal(k3, (N, D), dtype=jnp.float32)
    dependency_labels = jax.random.randint(k4, (N,), 0, 3)
    relevance_scores = jax.random.normal(k5, (B, I), dtype=jnp.float32)
    relevance_labels = (jax.random.uniform(k6, (B, I)) > 0.5).astype(jnp.float32)

    dependency_types = ["continuation", "pronoun_reference", "clarification",
                        "topic_reference", "agreement", "follow_up",
                        "example_request", "none"]

    predictions = {"attention_weights": attention_weights,
                   "relevance_scores": relevance_scores}
    targets = {"target_weights": target_weights,
               "relevance_labels": relevance_labels,
               "dependency_labels": dependency_labels}

    losses = dependency_aware_loss(predictions, targets, message_embeddings,
                                   dependency_types)
    total = jax.block_until_ready(losses["total"])
    assert bool(jnp.isfinite(total)), "non-finite total loss"
    for k in ("relevance", "contrastive", "ranking", "margin"):
        assert bool(jnp.isfinite(jax.block_until_ready(losses[k])))
    print("KERNEL_OK")
</pallas_src>

<mosaic_0001>
module attributes {stable_mosaic.version = 11 : i64} {
  func.func @_fused_loss_kernel(%arg0: i32, %arg1: i32, %arg2: memref<8x32xf32, #tpu.memory_space<vmem>>, %arg3: memref<8x32xf32, #tpu.memory_space<vmem>>, %arg4: memref<8x1xi32, #tpu.memory_space<vmem>>, %arg5: memref<1x8xi32, #tpu.memory_space<vmem>>, %arg6: memref<8x16xf32, #tpu.memory_space<vmem>>, %arg7: memref<8x16xf32, #tpu.memory_space<vmem>>, %arg8: memref<8x1xf32, #tpu.memory_space<vmem>>, %arg9: memref<8x16xf32, #tpu.memory_space<vmem>>, %arg10: memref<8x16xf32, #tpu.memory_space<vmem>>, %arg11: memref<1x128xf32, #tpu.memory_space<vmem>>, %arg12: memref<8x32xbf16, #tpu.memory_space<vmem>>, %arg13: memref<8x1xf32, #tpu.memory_space<vmem>>, %arg14: memref<8x1xf32, #tpu.memory_space<vmem>>, %arg15: memref<8x1xf32, #tpu.memory_space<vmem>>, %arg16: memref<8x1xf32, #tpu.memory_space<vmem>>, %arg17: memref<1x1xf32, #tpu.memory_space<vmem>>) attributes {dimension_semantics = [#tpu.dimension_semantics<arbitrary>, #tpu.dimension_semantics<arbitrary>], iteration_bounds = array<i64: 1, 1>, scalar_prefetch = 0 : i64, scratch_operands = 6 : i64, tpu.core_type = #tpu.core_type<tc>, window_params = [{transform_indices = @transform_0, window_bounds = array<i64: 8, 32>}, {transform_indices = @transform_1, window_bounds = array<i64: 8, 32>}, {transform_indices = @transform_2, window_bounds = array<i64: 8, 1>}, {transform_indices = @transform_3, window_bounds = array<i64: 1, 8>}, {pipeline_mode = #tpu.pipeline_mode<synchronous>, transform_indices = @transform_4, window_bounds = array<i64: 8, 16>}, {pipeline_mode = #tpu.pipeline_mode<synchronous>, transform_indices = @transform_5, window_bounds = array<i64: 8, 16>}, {pipeline_mode = #tpu.pipeline_mode<synchronous>, transform_indices = @transform_6, window_bounds = array<i64: 8, 1>}, {pipeline_mode = #tpu.pipeline_mode<synchronous>, transform_indices = @transform_7, window_bounds = array<i64: 8, 16>}, {pipeline_mode = #tpu.pipeline_mode<synchronous>, transform_indices = @transform_8, window_bounds = array<i64: 8, 16>}, {pipeline_mode = #tpu.pipeline_mode<synchronous>, transform_indices = @transform_9, window_bounds = array<i64: 1, 128>}]} {
    %c0_i32 = arith.constant 0 : i32
    %0 = arith.cmpi eq, %arg0, %c0_i32 : i32
    %c0_i32_0 = arith.constant 0 : i32
    %1 = arith.cmpi eq, %arg1, %c0_i32_0 : i32
    %2 = arith.andi %0, %1 : i1
    %3 = arith.extui %2 : i1 to i32
    %c0_i32_1 = arith.constant 0 : i32
    %4 = arith.cmpi ne, %3, %c0_i32_1 : i32
    scf.if %4 {
      %cst_42 = arith.constant 0.000000e+00 : f32
      %75 = vector.broadcast %cst_42 : f32 to vector<1x1xf32>
      %c0_43 = arith.constant 0 : index
      %c0_44 = arith.constant 0 : index
      %76 = vector.load %arg17[%c0_43, %c0_44] : memref<1x1xf32, #tpu.memory_space<vmem>>, vector<1x1xf32>
      tpu.vector_store %arg17[%c0_43, %c0_44], %75 {strides = array<i32>} : memref<1x1xf32, #tpu.memory_space<vmem>>, vector<1x1xf32>,
    } else {
    }
    %c0_i32_2 = arith.constant 0 : i32
    %5 = arith.cmpi eq, %arg1, %c0_i32_2 : i32
    %6 = arith.extui %5 : i1 to i32
    %c0_i32_3 = arith.constant 0 : i32
    %7 = arith.cmpi ne, %6, %c0_i32_3 : i32
    scf.if %7 {
      %cst_42 = arith.constant -1.000000e+30 : f32
      %75 = vector.broadcast %cst_42 : f32 to vector<8x1xf32>
      %c0_43 = arith.constant 0 : index
      %c0_44 = arith.constant 0 : index
      %76 = vector.load %arg13[%c0_43, %c0_44] : memref<8x1xf32, #tpu.memory_space<vmem>>, vector<8x1xf32>
      tpu.vector_store %arg13[%c0_43, %c0_44], %75 {strides = array<i32>} : memref<8x1xf32, #tpu.memory_space<vmem>>, vector<8x1xf32>,
      %cst_45 = arith.constant 0.000000e+00 : f32
      %77 = vector.broadcast %cst_45 : f32 to vector<8x1xf32>
      %c0_46 = arith.constant 0 : index
      %c0_47 = arith.constant 0 : index
      %78 = vector.load %arg14[%c0_46, %c0_47] : memref<8x1xf32, #tpu.memory_space<vmem>>, vector<8x1xf32>
      tpu.vector_store %arg14[%c0_46, %c0_47], %77 {strides = array<i32>} : memref<8x1xf32, #tpu.memory_space<vmem>>, vector<8x1xf32>,
      %cst_48 = arith.constant 0.000000e+00 : f32
      %79 = vector.broadcast %cst_48 : f32 to vector<8x1xf32>
      %c0_49 = arith.constant 0 : index
      %c0_50 = arith.constant 0 : index
      %80 = vector.load %arg15[%c0_49, %c0_50] : memref<8x1xf32, #tpu.memory_space<vmem>>, vector<8x1xf32>
      tpu.vector_store %arg15[%c0_49, %c0_50], %79 {strides = array<i32>} : memref<8x1xf32, #tpu.memory_space<vmem>>, vector<8x1xf32>,
      %cst_51 = arith.constant 0.000000e+00 : f32
      %81 = vector.broadcast %cst_51 : f32 to vector<8x1xf32>
      %c0_52 = arith.constant 0 : index
      %c0_53 = arith.constant 0 : index
      %82 = vector.load %arg16[%c0_52, %c0_53] : memref<8x1xf32, #tpu.memory_space<vmem>>, vector<8x1xf32>
      tpu.vector_store %arg16[%c0_52, %c0_53], %81 {strides = array<i32>} : memref<8x1xf32, #tpu.memory_space<vmem>>, vector<8x1xf32>,
      %c0_54 = arith.constant 0 : index
      %c0_55 = arith.constant 0 : index
      %83 = vector.load %arg2[%c0_54, %c0_55] : memref<8x32xf32, #tpu.memory_space<vmem>>, vector<8x32xf32>
      %84 = arith.mulf %83, %83 : vector<8x32xf32>
      %cst_56 = arith.constant dense<0.000000e+00> : vector<8xf32>
      %85 = vector.multi_reduction <add>, %84, %cst_56 [1] : vector<8x32xf32> to vector<8xf32>
      %86 = vector.shape_cast %85 : vector<8xf32> to vector<8x1xf32>
      %cst_57 = arith.constant 1.000000e-24 : f32
      %87 = vector.broadcast %cst_57 : f32 to vector<8x1xf32>
      %88 = arith.addf %86, %87 : vector<8x1xf32>
      %89 = math.rsqrt %88 : vector<8x1xf32>
      %90 = vector.broadcast %89 : vector<8x1xf32> to vector<8x32xf32>
      %91 = arith.mulf %83, %90 : vector<8x32xf32>
      %92 = arith.truncf %91 : vector<8x32xf32> to vector<8x32xbf16>
      %c0_58 = arith.constant 0 : index
      %c0_59 = arith.constant 0 : index
      %93 = vector.load %arg12[%c0_58, %c0_59] : memref<8x32xbf16, #tpu.memory_space<vmem>>, vector<8x32xbf16>
      tpu.vector_store %arg12[%c0_58, %c0_59], %92 {strides = array<i32>} : memref<8x32xbf16, #tpu.memory_space<vmem>>, vector<8x32xbf16>,
    } else {
    }
    %c0 = arith.constant 0 : index
    %c0_4 = arith.constant 0 : index
    %8 = vector.load %arg3[%c0, %c0_4] : memref<8x32xf32, #tpu.memory_space<vmem>>, vector<8x32xf32>
    %9 = arith.mulf %8, %8 : vector<8x32xf32>
    %cst = arith.constant dense<0.000000e+00> : vector<8xf32>
    %10 = vector.multi_reduction <add>, %9, %cst [1] : vector<8x32xf32> to vector<8xf32>
    %11 = vector.shape_cast %10 : vector<8xf32> to vector<8x1xf32>
    %cst_5 = arith.constant 1.000000e-24 : f32
    %12 = vector.broadcast %cst_5 : f32 to vector<8x1xf32>
    %13 = arith.addf %11, %12 : vector<8x1xf32>
    %14 = math.rsqrt %13 : vector<8x1xf32>
    %15 = vector.broadcast %14 : vector<8x1xf32> to vector<8x32xf32>
    %16 = arith.mulf %8, %15 : vector<8x32xf32>
    %17 = arith.truncf %16 : vector<8x32xf32> to vector<8x32xbf16>
    %c0_6 = arith.constant 0 : index
    %c0_7 = arith.constant 0 : index
    %18 = vector.load %arg12[%c0_6, %c0_7] : memref<8x32xbf16, #tpu.memory_space<vmem>>, vector<8x32xbf16>
    %cst_8 = arith.constant dense<0.000000e+00> : vector<8x8xf32>
    %19 = tpu.matmul %18, %17, %cst_8 {dimension_numbers = #tpu.dot_dimension_numbers<[1], [1], [0], [0], [0, 0, 1, 0], [], []>} : vector<8x32xbf16>, vector<8x32xbf16>, vector<8x8xf32> -> vector<8x8xf32>
    %cst_9 = arith.constant 14.2857141 : f32
    %20 = vector.broadcast %cst_9 : f32 to vector<8x8xf32>
    %21 = arith.mulf %19, %20 : vector<8x8xf32>
    %22 = tpu.iota {dimensions = array<i32: 0>} : vector<8x8xi32>
    %c8_i32 = arith.constant 8 : i32
    %23 = arith.muli %arg0, %c8_i32 : i32
    %24 = vector.broadcast %23 : i32 to vector<8x8xi32>
    %25 = arith.addi %22, %24 : vector<8x8xi32>
    %26 = tpu.iota {dimensions = array<i32: 1>} : vector<8x8xi32>
    %c8_i32_10 = arith.constant 8 : i32
    %27 = arith.muli %arg1, %c8_i32_10 : i32
    %28 = vector.broadcast %27 : i32 to vector<8x8xi32>
    %29 = arith.addi %26, %28 : vector<8x8xi32>
    %c0_11 = arith.constant 0 : index
    %c0_12 = arith.constant 0 : index
    %30 = vector.load %arg4[%c0_11, %c0_12] : memref<8x1xi32, #tpu.memory_space<vmem>>, vector<8x1xi32>
    %c0_13 = arith.constant 0 : index
    %c0_14 = arith.constant 0 : index
    %31 = vector.load %arg5[%c0_13, %c0_14] : memref<1x8xi32, #tpu.memory_space<vmem>>, vector<1x8xi32>
    %32 = vector.broadcast %30 : vector<8x1xi32> to vector<8x8xi32>
    %33 = vector.broadcast %31 : vector<1x8xi32> to vector<8x8xi32>
    %34 = arith.cmpi eq, %32, %33 : vector<8x8xi32>
    %35 = arith.cmpi ne, %25, %29 : vector<8x8xi32>
    %36 = arith.andi %34, %35 : vector<8x8xi1>
    %cst_15 = arith.constant 1.000000e+00 : f32
    %cst_16 = arith.constant 0.000000e+00 : f32
    %37 = vector.broadcast %cst_15 : f32 to vector<8x8xf32>
    %38 = vector.broadcast %cst_16 : f32 to vector<8x8xf32>
    %39 = arith.select %36, %37, %38 : vector<8x8xi1>, vector<8x8xf32>
    %c0_17 = arith.constant 0 : index
    %c0_18 = arith.constant 0 : index
    %40 = vector.load %arg13[%c0_17, %c0_18] : memref<8x1xf32, #tpu.memory_space<vmem>>, vector<8x1xf32>
    %cst_19 = arith.constant dense<0xFF800000> : vector<8xf32>
    %41 = vector.multi_reduction <maximumf>, %21, %cst_19 [1] : vector<8x8xf32> to vector<8xf32>
    %42 = vector.shape_cast %41 : vector<8xf32> to vector<8x1xf32>
    %43 = arith.maximumf %40, %42 : vector<8x1xf32>
    %c0_20 = arith.constant 0 : index
    %c0_21 = arith.constant 0 : index
    %44 = vector.load %arg14[%c0_20, %c0_21] : memref<8x1xf32, #tpu.memory_space<vmem>>, vector<8x1xf32>
    %45 = arith.subf %40, %43 : vector<8x1xf32>
    %46 = math.exp %45 : vector<8x1xf32>
    %47 = arith.mulf %44, %46 : vector<8x1xf32>
    %48 = vector.broadcast %43 : vector<8x1xf32> to vector<8x8xf32>
    %49 = arith.subf %21, %48 : vector<8x8xf32>
    %50 = math.exp %49 : vector<8x8xf32>
    %cst_22 = arith.constant dense<0.000000e+00> : vector<8xf32>
    %51 = vector.multi_reduction <add>, %50, %cst_22 [1] : vector<8x8xf32> to vector<8xf32>
    %52 = vector.shape_cast %51 : vector<8xf32> to vector<8x1xf32>
    %53 = arith.addf %47, %52 : vector<8x1xf32>
    %c0_23 = arith.constant 0 : index
    %c0_24 = arith.constant 0 : index
    %54 = vector.load %arg14[%c0_23, %c0_24] : memref<8x1xf32, #tpu.memory_space<vmem>>, vector<8x1xf32>
    tpu.vector_store %arg14[%c0_23, %c0_24], %53 {strides = array<i32>} : memref<8x1xf32, #tpu.memory_space<vmem>>, vector<8x1xf32>,
    %c0_25 = arith.constant 0 : index
    %c0_26 = arith.constant 0 : index
    %55 = vector.load %arg15[%c0_25, %c0_26] : memref<8x1xf32, #tpu.memory_space<vmem>>, vector<8x1xf32>
    %56 = arith.mulf %39, %21 : vector<8x8xf32>
    %cst_27 = arith.constant dense<0.000000e+00> : vector<8xf32>
    %57 = vector.multi_reduction <add>, %56, %cst_27 [1] : vector<8x8xf32> to vector<8xf32>
    %58 = vector.shape_cast %57 : vector<8xf32> to vector<8x1xf32>
    %59 = arith.addf %55, %58 : vector<8x1xf32>
    %c0_28 = arith.constant 0 : index
    %c0_29 = arith.constant 0 : index
    %60 = vector.load %arg15[%c0_28, %c0_29] : memref<8x1xf32, #tpu.memory_space<vmem>>, vector<8x1xf32>
    tpu.vector_store %arg15[%c0_28, %c0_29], %59 {strides = array<i32>} : memref<8x1xf32, #tpu.memory_space<vmem>>, vector<8x1xf32>,
    %c0_30 = arith.constant 0 : index
    %c0_31 = arith.constant 0 : index
    %61 = vector.load %arg16[%c0_30, %c0_31] : memref<8x1xf32, #tpu.memory_space<vmem>>, vector<8x1xf32>
    %cst_32 = arith.constant dense<0.000000e+00> : vector<8xf32>
    %62 = vector.multi_reduction <add>, %39, %cst_32 [1] : vector<8x8xf32> to vector<8xf32>
    %63 = vector.shape_cast %62 : vector<8xf32> to vector<8x1xf32>
    %64 = arith.addf %61, %63 : vector<8x1xf32>
    %c0_33 = arith.constant 0 : index
    %c0_34 = arith.constant 0 : index
    %65 = vector.load %arg16[%c0_33, %c0_34] : memref<8x1xf32, #tpu.memory_space<vmem>>, vector<8x1xf32>
    tpu.vector_store %arg16[%c0_33, %c0_34], %64 {strides = array<i32>} : memref<8x1xf32, #tpu.memory_space<vmem>>, vector<8x1xf32>,
    %c0_35 = arith.constant 0 : index
    %c0_36 = arith.constant 0 : index
    %66 = vector.load %arg13[%c0_35, %c0_36] : memref<8x1xf32, #tpu.memory_space<vmem>>, vector<8x1xf32>
    tpu.vector_store %arg13[%c0_35, %c0_36], %43 {strides = array<i32>} : memref<8x1xf32, #tpu.memory_space<vmem>>, vector<8x1xf32>,
    %c0_i32_37 = arith.constant 0 : i32
    %67 = arith.cmpi eq, %arg1, %c0_i32_37 : i32
    %68 = arith.extui %67 : i1 to i32
    %c0_i32_38 = arith.constant 0 : i32
    %69 = arith.cmpi ne, %68, %c0_i32_38 : i32
    scf.if %69 {
      %c0_42 = arith.constant 0 : index
      %c0_43 = arith.constant 0 : index
      %75 = vector.load %arg14[%c0_42, %c0_43] : memref<8x1xf32, #tpu.memory_space<vmem>>, vector<8x1xf32>
      %cst_44 = arith.constant 9.99999993E-9 : f32
      %76 = vector.broadcast %cst_44 : f32 to vector<8x1xf32>
      %77 = arith.addf %75, %76 : vector<8x1xf32>
      %78 = math.log %77 : vector<8x1xf32>
      %c0_45 = arith.constant 0 : index
      %c0_46 = arith.constant 0 : index
      %79 = vector.load %arg16[%c0_45, %c0_46] : memref<8x1xf32, #tpu.memory_space<vmem>>, vector<8x1xf32>
      %c0_47 = arith.constant 0 : index
      %c0_48 = arith.constant 0 : index
      %80 = vector.load %arg15[%c0_47, %c0_48] : memref<8x1xf32, #tpu.memory_space<vmem>>, vector<8x1xf32>
      %c0_49 = arith.constant 0 : index
      %c0_50 = arith.constant 0 : index
      %81 = vector.load %arg13[%c0_49, %c0_50] : memref<8x1xf32, #tpu.memory_space<vmem>>, vector<8x1xf32>
      %82 = arith.addf %81, %78 : vector<8x1xf32>
      %83 = arith.mulf %79, %82 : vector<8x1xf32>
      %84 = arith.subf %80, %83 : vector<8x1xf32>
      %cst_51 = arith.constant 1.000000e+00 : f32
      %85 = vector.broadcast %cst_51 : f32 to vector<8x1xf32>
      %86 = arith.maximumf %79, %85 : vector<8x1xf32>
      %87 = arith.divf %84, %86 : vector<8x1xf32>
      %c0_52 = arith.constant 0 : index
      %c0_53 = arith.constant 0 : index
      %88 = vector.load %arg17[%c0_52, %c0_53] : memref<1x1xf32, #tpu.memory_space<vmem>>, vector<1x1xf32>
      %cst_54 = arith.constant dense<0.000000e+00> : vector<1xf32>
      %89 = vector.multi_reduction <add>, %87, %cst_54 [0] : vector<8x1xf32> to vector<1xf32>
      %90 = vector.shape_cast %89 : vector<1xf32> to vector<1x1xf32>
      %91 = arith.addf %88, %90 : vector<1x1xf32>
      %c0_55 = arith.constant 0 : index
      %c0_56 = arith.constant 0 : index
      %92 = vector.load %arg17[%c0_55, %c0_56] : memref<1x1xf32, #tpu.memory_space<vmem>>, vector<1x1xf32>
      tpu.vector_store %arg17[%c0_55, %c0_56], %91 {strides = array<i32>} : memref<1x1xf32, #tpu.memory_space<vmem>>, vector<1x1xf32>,
    } else {
    }
    %c0_i32_39 = arith.constant 0 : i32
    %70 = arith.cmpi eq, %arg0, %c0_i32_39 : i32
    %c0_i32_40 = arith.constant 0 : i32
    %71 = arith.cmpi eq, %arg1, %c0_i32_40 : i32
    %72 = arith.andi %70, %71 : i1
    %73 = arith.extui %72 : i1 to i32
    %c0_i32_41 = arith.constant 0 : i32
    %74 = arith.cmpi ne, %73, %c0_i32_41 : i32
    scf.if %74 {
      %c0_42 = arith.constant 0 : index
      %c0_43 = arith.constant 0 : index
      %75 = vector.load %arg17[%c0_42, %c0_43] : memref<1x1xf32, #tpu.memory_space<vmem>>, vector<1x1xf32>
      %cst_44 = arith.constant -1.250000e-02 : f32
      %76 = vector.broadcast %cst_44 : f32 to vector<1x1xf32>
      %77 = arith.mulf %75, %76 : vector<1x1xf32>
      %c0_45 = arith.constant 0 : index
      %c0_46 = arith.constant 0 : index
      %78 = vector.load %arg6[%c0_45, %c0_46] : memref<8x16xf32, #tpu.memory_space<vmem>>, vector<8x16xf32>
      %c0_47 = arith.constant 0 : index
      %c0_48 = arith.constant 0 : index
      %79 = vector.load %arg7[%c0_47, %c0_48] : memref<8x16xf32, #tpu.memory_space<vmem>>, vector<8x16xf32>
      %cst_49 = arith.constant 0.000000e+00 : f32
      %80 = vector.broadcast %cst_49 : f32 to vector<8x16xf32>
      %81 = arith.cmpf ogt, %79, %80 : vector<8x16xf32>
      %cst_50 = arith.constant 1.000000e-30 : f32
      %82 = vector.broadcast %cst_50 : f32 to vector<8x16xf32>
      %83 = arith.maximumf %79, %82 : vector<8x16xf32>
      %84 = math.log %83 : vector<8x16xf32>
      %85 = arith.mulf %79, %84 : vector<8x16xf32>
      %cst_51 = arith.constant 0.000000e+00 : f32
      %86 = vector.broadcast %cst_51 : f32 to vector<8x16xf32>
      %87 = arith.select %81, %85, %86 : vector<8x16xi1>, vector<8x16xf32>
      %cst_52 = arith.constant 1.000000e-10 : f32
      %88 = vector.broadcast %cst_52 : f32 to vector<8x16xf32>
      %89 = arith.addf %78, %88 : vector<8x16xf32>
      %90 = math.log %89 : vector<8x16xf32>
      %91 = arith.mulf %79, %90 : vector<8x16xf32>
      %92 = arith.subf %87, %91 : vector<8x16xf32>
      %cst_53 = arith.constant dense<0.000000e+00> : vector<8xf32>
      %93 = vector.multi_reduction <add>, %92, %cst_53 [1] : vector<8x16xf32> to vector<8xf32>
      %94 = vector.shape_cast %93 : vector<8xf32> to vector<8x1xf32>
      %c0_54 = arith.constant 0 : index
      %c0_55 = arith.constant 0 : index
      %95 = vector.load %arg8[%c0_54, %c0_55] : memref<8x1xf32, #tpu.memory_space<vmem>>, vector<8x1xf32>
      %96 = arith.mulf %94, %95 : vector<8x1xf32>
      %cst_56 = arith.constant dense<0.000000e+00> : vector<1xf32>
      %97 = vector.multi_reduction <add>, %96, %cst_56 [0] : vector<8x1xf32> to vector<1xf32>
      %98 = vector.shape_cast %97 : vector<1xf32> to vector<1x1xf32>
      %cst_57 = arith.constant 1.250000e-01 : f32
      %99 = vector.broadcast %cst_57 : f32 to vector<1x1xf32>
      %100 = arith.mulf %98, %99 : vector<1x1xf32>
      %c0_58 = arith.constant 0 : index
      %c0_59 = arith.constant 0 : index
      %101 = vector.load %arg10[%c0_58, %c0_59] : memref<8x16xf32, #tpu.memory_space<vmem>>, vector<8x16xf32>
      %c0_60 = arith.constant 0 : index
      %c0_61 = arith.constant 0 : index
      %102 = vector.load %arg9[%c0_60, %c0_61] : memref<8x16xf32, #tpu.memory_space<vmem>>, vector<8x16xf32>
      %cst_62 = arith.constant 1.000000e+00 : f32
      %103 = vector.broadcast %cst_62 : f32 to vector<8x16xf32>
      %104 = arith.mulf %102, %103 : vector<8x16xf32>
      %cst_63 = arith.constant dense<0xFF800000> : vector<8xf32>
      %105 = vector.multi_reduction <maximumf>, %104, %cst_63 [1] : vector<8x16xf32> to vector<8xf32>
      %106 = vector.shape_cast %105 : vector<8xf32> to vector<8x1xf32>
      %107 = vector.broadcast %106 : vector<8x1xf32> to vector<8x16xf32>
      %108 = arith.subf %104, %107 : vector<8x16xf32>
      %109 = math.exp %108 : vector<8x16xf32>
      %cst_64 = arith.constant dense<0.000000e+00> : vector<8xf32>
      %110 = vector.multi_reduction <add>, %109, %cst_64 [1] : vector<8x16xf32> to vector<8xf32>
      %111 = vector.shape_cast %110 : vector<8xf32> to vector<8x1xf32>
      %112 = math.log %111 : vector<8x1xf32>
      %113 = vector.broadcast %112 : vector<8x1xf32> to vector<8x16xf32>
      %114 = arith.subf %108, %113 : vector<8x16xf32>
      %cst_65 = arith.constant dense<0.000000e+00> : vector<8xf32>
      %115 = vector.multi_reduction <add>, %101, %cst_65 [1] : vector<8x16xf32> to vector<8xf32>
      %116 = vector.shape_cast %115 : vector<8xf32> to vector<8x1xf32>
      %cst_66 = arith.constant 9.99999993E-9 : f32
      %117 = vector.broadcast %cst_66 : f32 to vector<8x1xf32>
      %118 = arith.maximumf %116, %117 : vector<8x1xf32>
      %119 = vector.broadcast %118 : vector<8x1xf32> to vector<8x16xf32>
      %120 = arith.divf %101, %119 : vector<8x16xf32>
      %cst_67 = arith.constant 0.000000e+00 : f32
      %121 = vector.broadcast %cst_67 : f32 to vector<8x16xf32>
      %122 = arith.cmpf ogt, %120, %121 : vector<8x16xf32>
      %cst_68 = arith.constant 1.000000e-30 : f32
      %123 = vector.broadcast %cst_68 : f32 to vector<8x16xf32>
      %124 = arith.maximumf %120, %123 : vector<8x16xf32>
      %125 = math.log %124 : vector<8x16xf32>
      %126 = arith.mulf %120, %125 : vector<8x16xf32>
      %cst_69 = arith.constant 0.000000e+00 : f32
      %127 = vector.broadcast %cst_69 : f32 to vector<8x16xf32>
      %128 = arith.select %122, %126, %127 : vector<8x16xi1>, vector<8x16xf32>
      %129 = arith.mulf %120, %114 : vector<8x16xf32>
      %130 = arith.subf %128, %129 : vector<8x16xf32>
      %cst_70 = arith.constant dense<0.000000e+00> : vector<8xf32>
      %131 = vector.multi_reduction <add>, %130, %cst_70 [1] : vector<8x16xf32> to vector<8xf32>
      %132 = vector.shape_cast %131 : vector<8xf32> to vector<8x1xf32>
      %cst_71 = arith.constant dense<0.000000e+00> : vector<1xf32>
      %133 = vector.multi_reduction <add>, %132, %cst_71 [0] : vector<8x1xf32> to vector<1xf32>
      %134 = vector.shape_cast %133 : vector<1xf32> to vector<1x1xf32>
      %cst_72 = arith.constant 3.750000e-02 : f32
      %135 = vector.broadcast %cst_72 : f32 to vector<1x1xf32>
      %136 = arith.mulf %134, %135 : vector<1x1xf32>
      %c0_73 = arith.constant 0 : index
      %c0_74 = arith.constant 0 : index
      %137 = vector.load %arg9[%c0_73, %c0_74] : memref<8x16xf32, #tpu.memory_space<vmem>>, vector<8x16xf32>
      %cst_75 = arith.constant 0.000000e+00 : f32
      %138 = vector.broadcast %cst_75 : f32 to vector<8x16xf32>
      %139 = arith.cmpf ogt, %101, %138 : vector<8x16xf32>
      %140 = arith.extui %139 : vector<8x16xi1> to vector<8x16xi32>
      %141 = arith.sitofp %140 : vector<8x16xi32> to vector<8x16xf32>
      %cst_76 = arith.constant 0.000000e+00 : f32
      %142 = vector.broadcast %cst_76 : f32 to vector<8x16xf32>
      %143 = arith.cmpf oeq, %101, %142 : vector<8x16xf32>
      %144 = arith.extui %143 : vector<8x16xi1> to vector<8x16xi32>
      %145 = arith.sitofp %144 : vector<8x16xi32> to vector<8x16xf32>
      %cst_77 = arith.constant dense<0.000000e+00> : vector<8xf32>
      %146 = vector.multi_reduction <add>, %145, %cst_77 [1] : vector<8x16xf32> to vector<8xf32>
      %147 = vector.shape_cast %146 : vector<8xf32> to vector<8x1xf32>
      %cst_78 = arith.constant 0.000000e+00 : f32
      %148 = vector.broadcast %cst_78 : f32 to vector<8x1xf32>
      %cst_79 = arith.constant 0.000000e+00 : f32
      %149 = vector.broadcast %cst_79 : f32 to vector<8x1xf32>
      %150 = vector.extract_strided_slice %137 {offsets = [0, 0], sizes = [8, 1], strides = [1, 1]} : vector<8x16xf32> to vector<8x1xf32>
      %151 = vector.extract_strided_slice %141 {offsets = [0, 0], sizes = [8, 1], strides = [1, 1]} : vector<8x16xf32> to vector<8x1xf32>
      %152 = vector.broadcast %150 : vector<8x1xf32> to vector<8x16xf32>
      %153 = arith.subf %152, %137 : vector<8x16xf32>
      %cst_80 = arith.constant 5.000000e-01 : f32
      %154 = vector.broadcast %cst_80 : f32 to vector<8x16xf32>
      %155 = arith.subf %154, %153 : vector<8x16xf32>
      %cst_81 = arith.constant 0.000000e+00 : f32
      %156 = vector.broadcast %cst_81 : f32 to vector<8x16xf32>
      %157 = arith.maximumf %155, %156 : vector<8x16xf32>
      %158 = arith.mulf %157, %145 : vector<8x16xf32>
      %cst_82 = arith.constant dense<0.000000e+00> : vector<8xf32>
      %159 = vector.multi_reduction <add>, %158, %cst_82 [1] : vector<8x16xf32> to vector<8xf32>
      %160 = vector.shape_cast %159 : vector<8xf32> to vector<8x1xf32>
      %161 = arith.mulf %151, %160 : vector<8x1xf32>
      %162 = arith.addf %148, %161 : vector<8x1xf32>
      %163 = arith.mulf %151, %147 : vector<8x1xf32>
      %164 = arith.addf %149, %163 : vector<8x1xf32>
      %165 = vector.extract_strided_slice %137 {offsets = [0, 1], sizes = [8, 1], strides = [1, 1]} : vector<8x16xf32> to vector<8x1xf32>
      %166 = vector.extract_strided_slice %141 {offsets = [0, 1], sizes = [8, 1], strides = [1, 1]} : vector<8x16xf32> to vector<8x1xf32>
      %167 = vector.broadcast %165 : vector<8x1xf32> to vector<8x16xf32>
      %168 = arith.subf %167, %137 : vector<8x16xf32>
      %cst_83 = arith.constant 5.000000e-01 : f32
      %169 = vector.broadcast %cst_83 : f32 to vector<8x16xf32>
      %170 = arith.subf %169, %168 : vector<8x16xf32>
      %cst_84 = arith.constant 0.000000e+00 : f32
      %171 = vector.broadcast %cst_84 : f32 to vector<8x16xf32>
      %172 = arith.maximumf %170, %171 : vector<8x16xf32>
      %173 = arith.mulf %172, %145 : vector<8x16xf32>
      %cst_85 = arith.constant dense<0.000000e+00> : vector<8xf32>
      %174 = vector.multi_reduction <add>, %173, %cst_85 [1] : vector<8x16xf32> to vector<8xf32>
      %175 = vector.shape_cast %174 : vector<8xf32> to vector<8x1xf32>
      %176 = arith.mulf %166, %175 : vector<8x1xf32>
      %177 = arith.addf %162, %176 : vector<8x1xf32>
      %178 = arith.mulf %166, %147 : vector<8x1xf32>
      %179 = arith.addf %164, %178 : vector<8x1xf32>
      %180 = vector.extract_strided_slice %137 {offsets = [0, 2], sizes = [8, 1], strides = [1, 1]} : vector<8x16xf32> to vector<8x1xf32>
      %181 = vector.extract_strided_slice %141 {offsets = [0, 2], sizes = [8, 1], strides = [1, 1]} : vector<8x16xf32> to vector<8x1xf32>
      %182 = vector.broadcast %180 : vector<8x1xf32> to vector<8x16xf32>
      %183 = arith.subf %182, %137 : vector<8x16xf32>
      %cst_86 = arith.constant 5.000000e-01 : f32
      %184 = vector.broadcast %cst_86 : f32 to vector<8x16xf32>
      %185 = arith.subf %184, %183 : vector<8x16xf32>
      %cst_87 = arith.constant 0.000000e+00 : f32
      %186 = vector.broadcast %cst_87 : f32 to vector<8x16xf32>
      %187 = arith.maximumf %185, %186 : vector<8x16xf32>
      %188 = arith.mulf %187, %145 : vector<8x16xf32>
      %cst_88 = arith.constant dense<0.000000e+00> : vector<8xf32>
      %189 = vector.multi_reduction <add>, %188, %cst_88 [1] : vector<8x16xf32> to vector<8xf32>
      %190 = vector.shape_cast %189 : vector<8xf32> to vector<8x1xf32>
      %191 = arith.mulf %181, %190 : vector<8x1xf32>
      %192 = arith.addf %177, %191 : vector<8x1xf32>
      %193 = arith.mulf %181, %147 : vector<8x1xf32>
      %194 = arith.addf %179, %193 : vector<8x1xf32>
      %195 = vector.extract_strided_slice %137 {offsets = [0, 3], sizes = [8, 1], strides = [1, 1]} : vector<8x16xf32> to vector<8x1xf32>
      %196 = vector.extract_strided_slice %141 {offsets = [0, 3], sizes = [8, 1], strides = [1, 1]} : vector<8x16xf32> to vector<8x1xf32>
      %197 = vector.broadcast %195 : vector<8x1xf32> to vector<8x16xf32>
      %198 = arith.subf %197, %137 : vector<8x16xf32>
      %cst_89 = arith.constant 5.000000e-01 : f32
      %199 = vector.broadcast %cst_89 : f32 to vector<8x16xf32>
      %200 = arith.subf %199, %198 : vector<8x16xf32>
      %cst_90 = arith.constant 0.000000e+00 : f32
      %201 = vector.broadcast %cst_90 : f32 to vector<8x16xf32>
      %202 = arith.maximumf %200, %201 : vector<8x16xf32>
      %203 = arith.mulf %202, %145 : vector<8x16xf32>
      %cst_91 = arith.constant dense<0.000000e+00> : vector<8xf32>
      %204 = vector.multi_reduction <add>, %203, %cst_91 [1] : vector<8x16xf32> to vector<8xf32>
      %205 = vector.shape_cast %204 : vector<8xf32> to vector<8x1xf32>
      %206 = arith.mulf %196, %205 : vector<8x1xf32>
      %207 = arith.addf %192, %206 : vector<8x1xf32>
      %208 = arith.mulf %196, %147 : vector<8x1xf32>
      %209 = arith.addf %194, %208 : vector<8x1xf32>
      %210 = vector.extract_strided_slice %137 {offsets = [0, 4], sizes = [8, 1], strides = [1, 1]} : vector<8x16xf32> to vector<8x1xf32>
      %211 = vector.extract_strided_slice %141 {offsets = [0, 4], sizes = [8, 1], strides = [1, 1]} : vector<8x16xf32> to vector<8x1xf32>
      %212 = vector.broadcast %210 : vector<8x1xf32> to vector<8x16xf32>
      %213 = arith.subf %212, %137 : vector<8x16xf32>
      %cst_92 = arith.constant 5.000000e-01 : f32
      %214 = vector.broadcast %cst_92 : f32 to vector<8x16xf32>
      %215 = arith.subf %214, %213 : vector<8x16xf32>
      %cst_93 = arith.constant 0.000000e+00 : f32
      %216 = vector.broadcast %cst_93 : f32 to vector<8x16xf32>
      %217 = arith.maximumf %215, %216 : vector<8x16xf32>
      %218 = arith.mulf %217, %145 : vector<8x16xf32>
      %cst_94 = arith.constant dense<0.000000e+00> : vector<8xf32>
      %219 = vector.multi_reduction <add>, %218, %cst_94 [1] : vector<8x16xf32> to vector<8xf32>
      %220 = vector.shape_cast %219 : vector<8xf32> to vector<8x1xf32>
      %221 = arith.mulf %211, %220 : vector<8x1xf32>
      %222 = arith.addf %207, %221 : vector<8x1xf32>
      %223 = arith.mulf %211, %147 : vector<8x1xf32>
      %224 = arith.addf %209, %223 : vector<8x1xf32>
      %225 = vector.extract_strided_slice %137 {offsets = [0, 5], sizes = [8, 1], strides = [1, 1]} : vector<8x16xf32> to vector<8x1xf32>
      %226 = vector.extract_strided_slice %141 {offsets = [0, 5], sizes = [8, 1], strides = [1, 1]} : vector<8x16xf32> to vector<8x1xf32>
      %227 = vector.broadcast %225 : vector<8x1xf32> to vector<8x16xf32>
      %228 = arith.subf %227, %137 : vector<8x16xf32>
      %cst_95 = arith.constant 5.000000e-01 : f32
      %229 = vector.broadcast %cst_95 : f32 to vector<8x16xf32>
      %230 = arith.subf %229, %228 : vector<8x16xf32>
      %cst_96 = arith.constant 0.000000e+00 : f32
      %231 = vector.broadcast %cst_96 : f32 to vector<8x16xf32>
      %232 = arith.maximumf %230, %231 : vector<8x16xf32>
      %233 = arith.mulf %232, %145 : vector<8x16xf32>
      %cst_97 = arith.constant dense<0.000000e+00> : vector<8xf32>
      %234 = vector.multi_reduction <add>, %233, %cst_97 [1] : vector<8x16xf32> to vector<8xf32>
      %235 = vector.shape_cast %234 : vector<8xf32> to vector<8x1xf32>
      %236 = arith.mulf %226, %235 : vector<8x1xf32>
      %237 = arith.addf %222, %236 : vector<8x1xf32>
      %238 = arith.mulf %226, %147 : vector<8x1xf32>
      %239 = arith.addf %224, %238 : vector<8x1xf32>
      %240 = vector.extract_strided_slice %137 {offsets = [0, 6], sizes = [8, 1], strides = [1, 1]} : vector<8x16xf32> to vector<8x1xf32>
      %241 = vector.extract_strided_slice %141 {offsets = [0, 6], sizes = [8, 1], strides = [1, 1]} : vector<8x16xf32> to vector<8x1xf32>
      %242 = vector.broadcast %240 : vector<8x1xf32> to vector<8x16xf32>
      %243 = arith.subf %242, %137 : vector<8x16xf32>
      %cst_98 = arith.constant 5.000000e-01 : f32
      %244 = vector.broadcast %cst_98 : f32 to vector<8x16xf32>
      %245 = arith.subf %244, %243 : vector<8x16xf32>
      %cst_99 = arith.constant 0.000000e+00 : f32
      %246 = vector.broadcast %cst_99 : f32 to vector<8x16xf32>
      %247 = arith.maximumf %245, %246 : vector<8x16xf32>
      %248 = arith.mulf %247, %145 : vector<8x16xf32>
      %cst_100 = arith.constant dense<0.000000e+00> : vector<8xf32>
      %249 = vector.multi_reduction <add>, %248, %cst_100 [1] : vector<8x16xf32> to vector<8xf32>
      %250 = vector.shape_cast %249 : vector<8xf32> to vector<8x1xf32>
      %251 = arith.mulf %241, %250 : vector<8x1xf32>
      %252 = arith.addf %237, %251 : vector<8x1xf32>
      %253 = arith.mulf %241, %147 : vector<8x1xf32>
      %254 = arith.addf %239, %253 : vector<8x1xf32>
      %255 = vector.extract_strided_slice %137 {offsets = [0, 7], sizes = [8, 1], strides = [1, 1]} : vector<8x16xf32> to vector<8x1xf32>
      %256 = vector.extract_strided_slice %141 {offsets = [0, 7], sizes = [8, 1], strides = [1, 1]} : vector<8x16xf32> to vector<8x1xf32>
      %257 = vector.broadcast %255 : vector<8x1xf32> to vector<8x16xf32>
      %258 = arith.subf %257, %137 : vector<8x16xf32>
      %cst_101 = arith.constant 5.000000e-01 : f32
      %259 = vector.broadcast %cst_101 : f32 to vector<8x16xf32>
      %260 = arith.subf %259, %258 : vector<8x16xf32>
      %cst_102 = arith.constant 0.000000e+00 : f32
      %261 = vector.broadcast %cst_102 : f32 to vector<8x16xf32>
      %262 = arith.maximumf %260, %261 : vector<8x16xf32>
      %263 = arith.mulf %262, %145 : vector<8x16xf32>
      %cst_103 = arith.constant dense<0.000000e+00> : vector<8xf32>
      %264 = vector.multi_reduction <add>, %263, %cst_103 [1] : vector<8x16xf32> to vector<8xf32>
      %265 = vector.shape_cast %264 : vector<8xf32> to vector<8x1xf32>
      %266 = arith.mulf %256, %265 : vector<8x1xf32>
      %267 = arith.addf %252, %266 : vector<8x1xf32>
      %268 = arith.mulf %256, %147 : vector<8x1xf32>
      %269 = arith.addf %254, %268 : vector<8x1xf32>
      %270 = vector.extract_strided_slice %137 {offsets = [0, 8], sizes = [8, 1], strides = [1, 1]} : vector<8x16xf32> to vector<8x1xf32>
      %271 = vector.extract_strided_slice %141 {offsets = [0, 8], sizes = [8, 1], strides = [1, 1]} : vector<8x16xf32> to vector<8x1xf32>
      %272 = vector.broadcast %270 : vector<8x1xf32> to vector<8x16xf32>
      %273 = arith.subf %272, %137 : vector<8x16xf32>
      %cst_104 = arith.constant 5.000000e-01 : f32
      %274 = vector.broadcast %cst_104 : f32 to vector<8x16xf32>
      %275 = arith.subf %274, %273 : vector<8x16xf32>
      %cst_105 = arith.constant 0.000000e+00 : f32
      %276 = vector.broadcast %cst_105 : f32 to vector<8x16xf32>
      %277 = arith.maximumf %275, %276 : vector<8x16xf32>
      %278 = arith.mulf %277, %145 : vector<8x16xf32>
      %cst_106 = arith.constant dense<0.000000e+00> : vector<8xf32>
      %279 = vector.multi_reduction <add>, %278, %cst_106 [1] : vector<8x16xf32> to vector<8xf32>
      %280 = vector.shape_cast %279 : vector<8xf32> to vector<8x1xf32>
      %281 = arith.mulf %271, %280 : vector<8x1xf32>
      %282 = arith.addf %267, %281 : vector<8x1xf32>
      %283 = arith.mulf %271, %147 : vector<8x1xf32>
      %284 = arith.addf %269, %283 : vector<8x1xf32>
      %285 = vector.extract_strided_slice %137 {offsets = [0, 9], sizes = [8, 1], strides = [1, 1]} : vector<8x16xf32> to vector<8x1xf32>
      %286 = vector.extract_strided_slice %141 {offsets = [0, 9], sizes = [8, 1], strides = [1, 1]} : vector<8x16xf32> to vector<8x1xf32>
      %287 = vector.broadcast %285 : vector<8x1xf32> to vector<8x16xf32>
      %288 = arith.subf %287, %137 : vector<8x16xf32>
      %cst_107 = arith.constant 5.000000e-01 : f32
      %289 = vector.broadcast %cst_107 : f32 to vector<8x16xf32>
      %290 = arith.subf %289, %288 : vector<8x16xf32>
      %cst_108 = arith.constant 0.000000e+00 : f32
      %291 = vector.broadcast %cst_108 : f32 to vector<8x16xf32>
      %292 = arith.maximumf %290, %291 : vector<8x16xf32>
      %293 = arith.mulf %292, %145 : vector<8x16xf32>
      %cst_109 = arith.constant dense<0.000000e+00> : vector<8xf32>
      %294 = vector.multi_reduction <add>, %293, %cst_109 [1] : vector<8x16xf32> to vector<8xf32>
      %295 = vector.shape_cast %294 : vector<8xf32> to vector<8x1xf32>
      %296 = arith.mulf %286, %295 : vector<8x1xf32>
      %297 = arith.addf %282, %296 : vector<8x1xf32>
      %298 = arith.mulf %286, %147 : vector<8x1xf32>
      %299 = arith.addf %284, %298 : vector<8x1xf32>
      %300 = vector.extract_strided_slice %137 {offsets = [0, 10], sizes = [8, 1], strides = [1, 1]} : vector<8x16xf32> to vector<8x1xf32>
      %301 = vector.extract_strided_slice %141 {offsets = [0, 10], sizes = [8, 1], strides = [1, 1]} : vector<8x16xf32> to vector<8x1xf32>
      %302 = vector.broadcast %300 : vector<8x1xf32> to vector<8x16xf32>
      %303 = arith.subf %302, %137 : vector<8x16xf32>
      %cst_110 = arith.constant 5.000000e-01 : f32
      %304 = vector.broadcast %cst_110 : f32 to vector<8x16xf32>
      %305 = arith.subf %304, %303 : vector<8x16xf32>
      %cst_111 = arith.constant 0.000000e+00 : f32
      %306 = vector.broadcast %cst_111 : f32 to vector<8x16xf32>
      %307 = arith.maximumf %305, %306 : vector<8x16xf32>
      %308 = arith.mulf %307, %145 : vector<8x16xf32>
      %cst_112 = arith.constant dense<0.000000e+00> : vector<8xf32>
      %309 = vector.multi_reduction <add>, %308, %cst_112 [1] : vector<8x16xf32> to vector<8xf32>
      %310 = vector.shape_cast %309 : vector<8xf32> to vector<8x1xf32>
      %311 = arith.mulf %301, %310 : vector<8x1xf32>
      %312 = arith.addf %297, %311 : vector<8x1xf32>
      %313 = arith.mulf %301, %147 : vector<8x1xf32>
      %314 = arith.addf %299, %313 : vector<8x1xf32>
      %315 = vector.extract_strided_slice %137 {offsets = [0, 11], sizes = [8, 1], strides = [1, 1]} : vector<8x16xf32> to vector<8x1xf32>
      %316 = vector.extract_strided_slice %141 {offsets = [0, 11], sizes = [8, 1], strides = [1, 1]} : vector<8x16xf32> to vector<8x1xf32>
      %317 = vector.broadcast %315 : vector<8x1xf32> to vector<8x16xf32>
      %318 = arith.subf %317, %137 : vector<8x16xf32>
      %cst_113 = arith.constant 5.000000e-01 : f32
      %319 = vector.broadcast %cst_113 : f32 to vector<8x16xf32>
      %320 = arith.subf %319, %318 : vector<8x16xf32>
      %cst_114 = arith.constant 0.000000e+00 : f32
      %321 = vector.broadcast %cst_114 : f32 to vector<8x16xf32>
      %322 = arith.maximumf %320, %321 : vector<8x16xf32>
      %323 = arith.mulf %322, %145 : vector<8x16xf32>
      %cst_115 = arith.constant dense<0.000000e+00> : vector<8xf32>
      %324 = vector.multi_reduction <add>, %323, %cst_115 [1] : vector<8x16xf32> to vector<8xf32>
      %325 = vector.shape_cast %324 : vector<8xf32> to vector<8x1xf32>
      %326 = arith.mulf %316, %325 : vector<8x1xf32>
      %327 = arith.addf %312, %326 : vector<8x1xf32>
      %328 = arith.mulf %316, %147 : vector<8x1xf32>
      %329 = arith.addf %314, %328 : vector<8x1xf32>
      %330 = vector.extract_strided_slice %137 {offsets = [0, 12], sizes = [8, 1], strides = [1, 1]} : vector<8x16xf32> to vector<8x1xf32>
      %331 = vector.extract_strided_slice %141 {offsets = [0, 12], sizes = [8, 1], strides = [1, 1]} : vector<8x16xf32> to vector<8x1xf32>
      %332 = vector.broadcast %330 : vector<8x1xf32> to vector<8x16xf32>
      %333 = arith.subf %332, %137 : vector<8x16xf32>
      %cst_116 = arith.constant 5.000000e-01 : f32
      %334 = vector.broadcast %cst_116 : f32 to vector<8x16xf32>
      %335 = arith.subf %334, %333 : vector<8x16xf32>
      %cst_117 = arith.constant 0.000000e+00 : f32
      %336 = vector.broadcast %cst_117 : f32 to vector<8x16xf32>
      %337 = arith.maximumf %335, %336 : vector<8x16xf32>
      %338 = arith.mulf %337, %145 : vector<8x16xf32>
      %cst_118 = arith.constant dense<0.000000e+00> : vector<8xf32>
      %339 = vector.multi_reduction <add>, %338, %cst_118 [1] : vector<8x16xf32> to vector<8xf32>
      %340 = vector.shape_cast %339 : vector<8xf32> to vector<8x1xf32>
      %341 = arith.mulf %331, %340 : vector<8x1xf32>
      %342 = arith.addf %327, %341 : vector<8x1xf32>
      %343 = arith.mulf %331, %147 : vector<8x1xf32>
      %344 = arith.addf %329, %343 : vector<8x1xf32>
      %345 = vector.extract_strided_slice %137 {offsets = [0, 13], sizes = [8, 1], strides = [1, 1]} : vector<8x16xf32> to vector<8x1xf32>
      %346 = vector.extract_strided_slice %141 {offsets = [0, 13], sizes = [8, 1], strides = [1, 1]} : vector<8x16xf32> to vector<8x1xf32>
      %347 = vector.broadcast %345 : vector<8x1xf32> to vector<8x16xf32>
      %348 = arith.subf %347, %137 : vector<8x16xf32>
      %cst_119 = arith.constant 5.000000e-01 : f32
      %349 = vector.broadcast %cst_119 : f32 to vector<8x16xf32>
      %350 = arith.subf %349, %348 : vector<8x16xf32>
      %cst_120 = arith.constant 0.000000e+00 : f32
      %351 = vector.broadcast %cst_120 : f32 to vector<8x16xf32>
      %352 = arith.maximumf %350, %351 : vector<8x16xf32>
      %353 = arith.mulf %352, %145 : vector<8x16xf32>
      %cst_121 = arith.constant dense<0.000000e+00> : vector<8xf32>
      %354 = vector.multi_reduction <add>, %353, %cst_121 [1] : vector<8x16xf32> to vector<8xf32>
      %355 = vector.shape_cast %354 : vector<8xf32> to vector<8x1xf32>
      %356 = arith.mulf %346, %355 : vector<8x1xf32>
      %357 = arith.addf %342, %356 : vector<8x1xf32>
      %358 = arith.mulf %346, %147 : vector<8x1xf32>
      %359 = arith.addf %344, %358 : vector<8x1xf32>
      %360 = vector.extract_strided_slice %137 {offsets = [0, 14], sizes = [8, 1], strides = [1, 1]} : vector<8x16xf32> to vector<8x1xf32>
      %361 = vector.extract_strided_slice %141 {offsets = [0, 14], sizes = [8, 1], strides = [1, 1]} : vector<8x16xf32> to vector<8x1xf32>
      %362 = vector.broadcast %360 : vector<8x1xf32> to vector<8x16xf32>
      %363 = arith.subf %362, %137 : vector<8x16xf32>
      %cst_122 = arith.constant 5.000000e-01 : f32
      %364 = vector.broadcast %cst_122 : f32 to vector<8x16xf32>
      %365 = arith.subf %364, %363 : vector<8x16xf32>
      %cst_123 = arith.constant 0.000000e+00 : f32
      %366 = vector.broadcast %cst_123 : f32 to vector<8x16xf32>
      %367 = arith.maximumf %365, %366 : vector<8x16xf32>
      %368 = arith.mulf %367, %145 : vector<8x16xf32>
      %cst_124 = arith.constant dense<0.000000e+00> : vector<8xf32>
      %369 = vector.multi_reduction <add>, %368, %cst_124 [1] : vector<8x16xf32> to vector<8xf32>
      %370 = vector.shape_cast %369 : vector<8xf32> to vector<8x1xf32>
      %371 = arith.mulf %361, %370 : vector<8x1xf32>
      %372 = arith.addf %357, %371 : vector<8x1xf32>
      %373 = arith.mulf %361, %147 : vector<8x1xf32>
      %374 = arith.addf %359, %373 : vector<8x1xf32>
      %375 = vector.extract_strided_slice %137 {offsets = [0, 15], sizes = [8, 1], strides = [1, 1]} : vector<8x16xf32> to vector<8x1xf32>
      %376 = vector.extract_strided_slice %141 {offsets = [0, 15], sizes = [8, 1], strides = [1, 1]} : vector<8x16xf32> to vector<8x1xf32>
      %377 = vector.broadcast %375 : vector<8x1xf32> to vector<8x16xf32>
      %378 = arith.subf %377, %137 : vector<8x16xf32>
      %cst_125 = arith.constant 5.000000e-01 : f32
      %379 = vector.broadcast %cst_125 : f32 to vector<8x16xf32>
      %380 = arith.subf %379, %378 : vector<8x16xf32>
      %cst_126 = arith.constant 0.000000e+00 : f32
      %381 = vector.broadcast %cst_126 : f32 to vector<8x16xf32>
      %382 = arith.maximumf %380, %381 : vector<8x16xf32>
      %383 = arith.mulf %382, %145 : vector<8x16xf32>
      %cst_127 = arith.constant dense<0.000000e+00> : vector<8xf32>
      %384 = vector.multi_reduction <add>, %383, %cst_127 [1] : vector<8x16xf32> to vector<8xf32>
      %385 = vector.shape_cast %384 : vector<8xf32> to vector<8x1xf32>
      %386 = arith.mulf %376, %385 : vector<8x1xf32>
      %387 = arith.addf %372, %386 : vector<8x1xf32>
      %388 = arith.mulf %376, %147 : vector<8x1xf32>
      %389 = arith.addf %374, %388 : vector<8x1xf32>
      %cst_128 = arith.constant dense<0.000000e+00> : vector<1xf32>
      %390 = vector.multi_reduction <add>, %387, %cst_128 [0] : vector<8x1xf32> to vector<1xf32>
      %391 = vector.shape_cast %390 : vector<1xf32> to vector<1x1xf32>
      %cst_129 = arith.constant dense<0.000000e+00> : vector<1xf32>
      %392 = vector.multi_reduction <add>, %389, %cst_129 [0] : vector<8x1xf32> to vector<1xf32>
      %393 = vector.shape_cast %392 : vector<1xf32> to vector<1x1xf32>
      %cst_130 = arith.constant 0.000000e+00 : f32
      %394 = vector.broadcast %cst_130 : f32 to vector<1x1xf32>
      %395 = arith.cmpf ogt, %393, %394 : vector<1x1xf32>
      %cst_131 = arith.constant 1.000000e+00 : f32
      %396 = vector.broadcast %cst_131 : f32 to vector<1x1xf32>
      %397 = arith.maximumf %393, %396 : vector<1x1xf32>
      %398 = arith.divf %391, %397 : vector<1x1xf32>
      %cst_132 = arith.constant 0.000000e+00 : f32
      %399 = vector.broadcast %cst_132 : f32 to vector<1x1xf32>
      %400 = arith.select %395, %398, %399 : vector<1x1xi1>, vector<1x1xf32>
      %cst_133 = arith.constant 1.000000e-01 : f32
      %401 = vector.broadcast %cst_133 : f32 to vector<1x1xf32>
      %402 = arith.mulf %400, %401 : vector<1x1xf32>
      %403 = arith.addf %100, %77 : vector<1x1xf32>
      %404 = arith.addf %403, %136 : vector<1x1xf32>
      %405 = arith.addf %404, %402 : vector<1x1xf32>
      %406 = tpu.iota {dimensions = array<i32: 1>} : vector<1x128xi32>
      %c0_i32_134 = arith.constant 0 : i32
      %407 = vector.broadcast %c0_i32_134 : i32 to vector<1x128xi32>
      %408 = arith.cmpi eq, %406, %407 : vector<1x128xi32>
      %cst_135 = arith.constant 0.000000e+00 : f32
      %409 = vector.shape_cast %100 : vector<1x1xf32> to vector<1x1xf32>
      %410 = vector.broadcast %409 : vector<1x1xf32> to vector<1x128xf32>
      %411 = vector.broadcast %cst_135 : f32 to vector<1x128xf32>
      %412 = arith.select %408, %410, %411 : vector<1x128xi1>, vector<1x128xf32>
      %c1_i32 = arith.constant 1 : i32
      %413 = vector.broadcast %c1_i32 : i32 to vector<1x128xi32>
      %414 = arith.cmpi eq, %406, %413 : vector<1x128xi32>
      %cst_136 = arith.constant 0.000000e+00 : f32
      %415 = vector.shape_cast %77 : vector<1x1xf32> to vector<1x1xf32>
      %416 = vector.broadcast %415 : vector<1x1xf32> to vector<1x128xf32>
      %417 = vector.broadcast %cst_136 : f32 to vector<1x128xf32>
      %418 = arith.select %414, %416, %417 : vector<1x128xi1>, vector<1x128xf32>
      %419 = arith.addf %412, %418 : vector<1x128xf32>
      %c2_i32 = arith.constant 2 : i32
      %420 = vector.broadcast %c2_i32 : i32 to vector<1x128xi32>
      %421 = arith.cmpi eq, %406, %420 : vector<1x128xi32>
      %cst_137 = arith.constant 0.000000e+00 : f32
      %422 = vector.shape_cast %136 : vector<1x1xf32> to vector<1x1xf32>
      %423 = vector.broadcast %422 : vector<1x1xf32> to vector<1x128xf32>
      %424 = vector.broadcast %cst_137 : f32 to vector<1x128xf32>
      %425 = arith.select %421, %423, %424 : vector<1x128xi1>, vector<1x128xf32>
      %426 = arith.addf %419, %425 : vector<1x128xf32>
      %c3_i32 = arith.constant 3 : i32
      %427 = vector.broadcast %c3_i32 : i32 to vector<1x128xi32>
      %428 = arith.cmpi eq, %406, %427 : vector<1x128xi32>
      %cst_138 = arith.constant 0.000000e+00 : f32
      %429 = vector.shape_cast %402 : vector<1x1xf32> to vector<1x1xf32>
      %430 = vector.broadcast %429 : vector<1x1xf32> to vector<1x128xf32>
      %431 = vector.broadcast %cst_138 : f32 to vector<1x128xf32>
      %432 = arith.select %428, %430, %431 : vector<1x128xi1>, vector<1x128xf32>
      %433 = arith.addf %426, %432 : vector<1x128xf32>
      %c4_i32 = arith.constant 4 : i32
      %434 = vector.broadcast %c4_i32 : i32 to vector<1x128xi32>
      %435 = arith.cmpi eq, %406, %434 : vector<1x128xi32>
      %cst_139 = arith.constant 0.000000e+00 : f32
      %436 = vector.shape_cast %405 : vector<1x1xf32> to vector<1x1xf32>
      %437 = vector.broadcast %436 : vector<1x1xf32> to vector<1x128xf32>
      %438 = vector.broadcast %cst_139 : f32 to vector<1x128xf32>
      %439 = arith.select %435, %437, %438 : vector<1x128xi1>, vector<1x128xf32>
      %440 = arith.addf %433, %439 : vector<1x128xf32>
      %c0_140 = arith.constant 0 : index
      %c0_141 = arith.constant 0 : index
      %441 = vector.load %arg11[%c0_140, %c0_141] : memref<1x128xf32, #tpu.memory_space<vmem>>, vector<1x128xf32>
      tpu.vector_store %arg11[%c0_140, %c0_141], %440 {strides = array<i32>} : memref<1x128xf32, #tpu.memory_space<vmem>>, vector<1x128xf32>,
    } else {
    }
    return
  }
  func.func @transform_0(%arg0: i32, %arg1: i32) -> (i32, i32) {
    %c0_i32 = arith.constant 0 : i32
    %c0_i32_0 = arith.constant 0 : i32
    return %arg0, %c0_i32 : i32, i32
  }
  func.func @transform_1(%arg0: i32, %arg1: i32) -> (i32, i32) {
    %c0_i32 = arith.constant 0 : i32
    %c0_i32_0 = arith.constant 0 : i32
    return %arg1, %c0_i32 : i32, i32
  }
  func.func @transform_2(%arg0: i32, %arg1: i32) -> (i32, i32) {
    %c0_i32 = arith.constant 0 : i32
    %c0_i32_0 = arith.constant 0 : i32
    return %arg0, %c0_i32 : i32, i32
  }
  func.func @transform_3(%arg0: i32, %arg1: i32) -> (i32, i32) {
    %c0_i32 = arith.constant 0 : i32
    %c0_i32_0 = arith.constant 0 : i32
    return %c0_i32, %arg1 : i32, i32
  }
  func.func @transform_4(%arg0: i32, %arg1: i32) -> (i32, i32) {
    %c0_i32 = arith.constant 0 : i32
    %c0_i32_0 = arith.constant 0 : i32
    %c0_i32_1 = arith.constant 0 : i32
    return %c0_i32, %c0_i32_0 : i32, i32
  }
  func.func @transform_5(%arg0: i32, %arg1: i32) -> (i32, i32) {
    %c0_i32 = arith.constant 0 : i32
    %c0_i32_0 = arith.constant 0 : i32
    %c0_i32_1 = arith.constant 0 : i32
    return %c0_i32, %c0_i32_0 : i32, i32
  }
  func.func @transform_6(%arg0: i32, %arg1: i32) -> (i32, i32) {
    %c0_i32 = arith.constant 0 : i32
    %c0_i32_0 = arith.constant 0 : i32
    %c0_i32_1 = arith.constant 0 : i32
    return %c0_i32, %c0_i32_0 : i32, i32
  }
  func.func @transform_7(%arg0: i32, %arg1: i32) -> (i32, i32) {
    %c0_i32 = arith.constant 0 : i32
    %c0_i32_0 = arith.constant 0 : i32
    %c0_i32_1 = arith.constant 0 : i32
    return %c0_i32, %c0_i32_0 : i32, i32
  }
  func.func @transform_8(%arg0: i32, %arg1: i32) -> (i32, i32) {
    %c0_i32 = arith.constant 0 : i32
    %c0_i32_0 = arith.constant 0 : i32
    %c0_i32_1 = arith.constant 0 : i32
    return %c0_i32, %c0_i32_0 : i32, i32
  }
  func.func @transform_9(%arg0: i32, %arg1: i32) -> (i32, i32) {
    %c0_i32 = arith.constant 0 : i32
    %c0_i32_0 = arith.constant 0 : i32
    %c0_i32_1 = arith.constant 0 : i32
    return %c0_i32, %c0_i32_0 : i32, i32
  }
}

</mosaic_0001>

<llo_original>
// kernel: tpu_custom_call.1
$region0: #{tpu_custom_call.1}
  #allocation0 [shape = 'u32[]', space=smem, size = 0x4, offset = 0x4, fixed_abs, tag = 'smem constant byte address 0x4 - core index']
  #allocation1 [shape = 'u32[72,128]{1,0:T(1,128)}', space=vmem, size = 0x9000, scoped, tag = 'internal scratch']
  #allocation2 [shape = 'bf16[8,32]{1,0:T(8,128)(2,1)}', space=vmem, size = 0x800, scoped, tag = 'scratch operand']
  #allocation3 [shape = 'f32[8,1]{1,0:T(8,128)}', space=vmem, size = 0x1000, scoped, tag = 'scratch operand']
  #allocation4 [shape = 'f32[8,1]{1,0:T(8,128)}', space=vmem, size = 0x1000, scoped, tag = 'scratch operand']
  #allocation5 [shape = 'f32[8,1]{1,0:T(8,128)}', space=vmem, size = 0x1000, scoped, tag = 'scratch operand']
  #allocation6 [shape = 'f32[8,1]{1,0:T(8,128)}', space=vmem, size = 0x1000, scoped, tag = 'scratch operand']
  #allocation7 [shape = 'f32[1,1]{1,0:T(1,128)}', space=vmem, size = 0x200, scoped, tag = 'scratch operand']
  %s0 = inlined_call_operand.vmem [shape: f32[8,32], index: 0, kind: input, shape index: {}]
  %s1 = inlined_call_operand.vmem [shape: f32[8,32], index: 1, kind: input, shape index: {}]
  %s2 = inlined_call_operand.vmem [shape: s32[8,1], index: 2, kind: input, shape index: {}]
  %s3 = inlined_call_operand.vmem [shape: s32[1,8], index: 3, kind: input, shape index: {}]
  %s4 = inlined_call_operand.hbm [shape: f32[8,16], index: 4, kind: input, shape index: {}]
  %s5 = inlined_call_operand.hbm [shape: f32[8,16], index: 5, kind: input, shape index: {}]
  %s6 = inlined_call_operand.vmem [shape: f32[8,1], index: 6, kind: input, shape index: {}]
  %s7 = inlined_call_operand.hbm [shape: f32[8,16], index: 7, kind: input, shape index: {}]
  %s8 = inlined_call_operand.hbm [shape: f32[8,16], index: 8, kind: input, shape index: {}]
  %s9 = inlined_call_operand.hbm [shape: f32[1,128], index: 9, kind: output, shape index: {}]
  %s10 = sld [smem:[#allocation0]]
  $region78: #{tpu_custom_call.1} parent=0
    _
  %s12 = ssub.s32 1, %s10
  %s13 = scalar_select 0, %s12, %s10
  $region1: #{tpu_custom_call.1} parent=0
    #allocation8 [shape = 'u8[4096]{0}', space=vmem, size = 0x1000, scoped, tag = 'input window, operand 4, single buffered']
    #allocation9 [shape = 's32[1]{0}', space=sflag, size = 0x4, scoped, tag = 'scoped memory for tpu_custom_call.1']
    #allocation10 [shape = 's32[1]{0}', space=sflag, size = 0x4, scoped, tag = 'scoped memory for tpu_custom_call.1']
    #allocation11 [shape = 'u8[4096]{0}', space=vmem, size = 0x1000, scoped, tag = 'input window, operand 5, single buffered']
    #allocation12 [shape = 's32[1]{0}', space=sflag, size = 0x4, scoped, tag = 'scoped memory for tpu_custom_call.1']
    #allocation13 [shape = 'u8[4096]{0}', space=vmem, size = 0x1000, scoped, tag = 'input window, operand 7, single buffered']
    #allocation14 [shape = 'u8[4096]{0}', space=vmem, size = 0x1000, scoped, tag = 'input window, operand 8, single buffered']
    #allocation15 [shape = 's32[1]{0}', space=sflag, size = 0x4, scoped, tag = 'scoped memory for tpu_custom_call.1']
    #allocation16 [shape = 'u8[512]{0}', space=vmem, size = 0x400, scoped, tag = 'output window, operand 0, single buffered']
    %14 = vsyncpa [#allocation9], 0
    %15 = vsyncpa [#allocation12], 0
    %16 = vsyncpa [#allocation15], 0
    %17 = vsyncpa [#allocation10], 0
    // Predicated region
    $region2: #{tpu_custom_call.1} parent=1 // pred_check
      _
    $region3: #{tpu_custom_call.1} parent=1 // pred_check_branch
      %19 = sbr.rel (0) target = $region5
    $region4: #{tpu_custom_call.1} parent=1 // pred_region
      _
    $region5: #{tpu_custom_call.1} parent=1 // pred_fallthru
      _
    // Predicated region
    $region6: #{tpu_custom_call.1} parent=1 // pred_check
      _
    $region7: #{tpu_custom_call.1} parent=1 // pred_check_branch
      %21 = sbr.rel (0) target = $region9
    $region8: #{tpu_custom_call.1} parent=1 // pred_region
      _
    $region9: #{tpu_custom_call.1} parent=1 // pred_fallthru
      _
    // Predicated region
    $region10: #{tpu_custom_call.1} parent=1 // pred_check
      _
    $region11: #{tpu_custom_call.1} parent=1 // pred_check_branch
      %23 = sbr.rel (0) target = $region13
    $region12: #{tpu_custom_call.1} parent=1 // pred_region
      _
    $region13: #{tpu_custom_call.1} parent=1 // pred_fallthru
      _
    // Predicated region
    $region14: #{tpu_custom_call.1} parent=1 // pred_check
      _
    $region15: #{tpu_custom_call.1} parent=1 // pred_check_branch
      %25 = sbr.rel (0) target = $region17
    $region16: #{tpu_custom_call.1} parent=1 // pred_region
      _
    $region17: #{tpu_custom_call.1} parent=1 // pred_fallthru
      _
    // Predicated region
    $region18: #{tpu_custom_call.1} parent=1 // pred_check
      _
    $region19: #{tpu_custom_call.1} parent=1 // pred_check_branch
      %27 = sbr.rel (0) target = $region21
    $region20: #{tpu_custom_call.1} parent=1 // pred_region
      %29 = vsyncadd [#allocation9], 0
      %s31 = sshll.u32 %s4, 4
      %s32 = int_to_ptr.hbm [resolvable:$true] %s31
      %s33 = sshll.u32 [#allocation8], 4
      %s34 = int_to_ptr.vmem [resolvable:$true] %s33
      %36 = dma.hbm_to_vmem [thread:$0]  %s32, 128, %s34, [#allocation9]
    $region21: #{tpu_custom_call.1} parent=1 // pred_fallthru
      _
    // Predicated region
    $region22: #{tpu_custom_call.1} parent=1 // pred_check
      _
    $region23: #{tpu_custom_call.1} parent=1 // pred_check_branch
      %38 = sbr.rel (0) target = $region25
    $region24: #{tpu_custom_call.1} parent=1 // pred_region
      %40 = vsyncadd [#allocation12], 0
      %s42 = sshll.u32 %s5, 4
      %s43 = int_to_ptr.hbm [resolvable:$true] %s42
      %s44 = sshll.u32 [#allocation11], 4
      %s45 = int_to_ptr.vmem [resolvable:$true] %s44
      %47 = dma.hbm_to_vmem [thread:$0]  %s43, 128, %s45, [#allocation12]
    $region25: #{tpu_custom_call.1} parent=1 // pred_fallthru
      _
    // Predicated region
    $region26: #{tpu_custom_call.1} parent=1 // pred_check
      _
    $region27: #{tpu_custom_call.1} parent=1 // pred_check_branch
      %49 = sbr.rel (0) target = $region29
    $region28: #{tpu_custom_call.1} parent=1 // pred_region
      _
    $region29: #{tpu_custom_call.1} parent=1 // pred_fallthru
      _
    // Predicated region
    $region30: #{tpu_custom_call.1} parent=1 // pred_check
      _
    $region31: #{tpu_custom_call.1} parent=1 // pred_check_branch
      %51 = sbr.rel (0) target = $region33
    $region32: #{tpu_custom_call.1} parent=1 // pred_region
      %53 = vsyncadd [#allocation12], 0
      %s55 = sshll.u32 %s7, 4
      %s56 = int_to_ptr.hbm [resolvable:$true] %s55
      %s57 = sshll.u32 [#allocation13], 4
      %s58 = int_to_ptr.vmem [resolvable:$true] %s57
      %60 = dma.hbm_to_vmem [thread:$0]  %s56, 128, %s58, [#allocation12]
    $region33: #{tpu_custom_call.1} parent=1 // pred_fallthru
      _
    // Predicated region
    $region34: #{tpu_custom_call.1} parent=1 // pred_check
      _
    $region35: #{tpu_custom_call.1} parent=1 // pred_check_branch
      %62 = sbr.rel (0) target = $region37
    $region36: #{tpu_custom_call.1} parent=1 // pred_region
      %64 = vsyncadd [#allocation15], 0
      %s66 = sshll.u32 %s8, 4
      %s67 = int_to_ptr.hbm [resolvable:$true] %s66
      %s68 = sshll.u32 [#allocation14], 4
      %s69 = int_to_ptr.vmem [resolvable:$true] %s68
      %71 = dma.hbm_to_vmem [thread:$0]  %s67, 128, %s69, [#allocation15]
    $region37: #{tpu_custom_call.1} parent=1 // pred_fallthru
      _
    // Predicated region
    $region38: #{tpu_custom_call.1} parent=1 // pred_check
      _
    $region39: #{tpu_custom_call.1} parent=1 // pred_check_branch
      %73 = sbr.rel (0) target = $region41
    $region40: #{tpu_custom_call.1} parent=1 // pred_region
      %75 = dma.done [#allocation9], 128
    $region41: #{tpu_custom_call.1} parent=1 // pred_fallthru
      _
    // Predicated region
    $region42: #{tpu_custom_call.1} parent=1 // pred_check
      _
    $region43: #{tpu_custom_call.1} parent=1 // pred_check_branch
      %77 = sbr.rel (0) target = $region45
    $region44: #{tpu_custom_call.1} parent=1 // pred_region
      %79 = dma.done [#allocation12], 128
    $region45: #{tpu_custom_call.1} parent=1 // pred_fallthru
      _
    // Predicated region
    $region46: #{tpu_custom_call.1} parent=1 // pred_check
      _
    $region47: #{tpu_custom_call.1} parent=1 // pred_check_branch
      %81 = sbr.rel (0) target = $region49
    $region48: #{tpu_custom_call.1} parent=1 // pred_region
      %83 = dma.done [#allocation12], 128
    $region49: #{tpu_custom_call.1} parent=1 // pred_fallthru
      _
    // Predicated region
    $region50: #{tpu_custom_call.1} parent=1 // pred_check
      _
    $region51: #{tpu_custom_call.1} parent=1 // pred_check_branch
      %85 = sbr.rel (0) target = $region53
    $region52: #{tpu_custom_call.1} parent=1 // pred_region
      %87 = dma.done [#allocation15], 128
    $region53: #{tpu_custom_call.1} parent=1 // pred_fallthru
      _
    %p89 = scmp.eq.s32.totalorder 0, 0
    %p90 = scmp.eq.s32.totalorder 0, 0
    %p91 = pnand %p89, %p90
    %p92 = pneg %p91
    // Predicated region
    $region54: #{tpu_custom_call.1} parent=1 // pred_check
      _
    $region55: #{tpu_custom_call.1} parent=1 // pred_check_branch
      %94 = sbr.rel (%p91) target = $region57
    $region56: #{tpu_custom_call.1} parent=1 // pred_region
      %vm95 = vcmask 0
      %96 = vst.msk [vmem:[#allocation7] sm:$0x1] %vm95, 0.0
    $region57: #{tpu_custom_call.1} parent=1 // pred_fallthru
      _
    // Predicated region
    $region58: #{tpu_custom_call.1} parent=1 // pred_check
      %p97 = pneg %p90
    $region59: #{tpu_custom_call.1} parent=1 // pred_check_branch
      %99 = sbr.rel (%p97) target = $region61
    $region60: #{tpu_custom_call.1} parent=1 // pred_region
      %vm100 = vcmask 7168
      %101 = vst.msk [vmem:[#allocation3] sm:$0xff] %vm100, -1e+30
      %102 = vst.msk [vmem:[#allocation4] sm:$0xff] %vm100, 0.0
      %103 = vst.msk [vmem:[#allocation5] sm:$0xff] %vm100, 0.0
      %104 = vst.msk [vmem:[#allocation6] sm:$0xff] %vm100, 0.0
      %v105 = vld [vmem:[%s0] sm:$0xff]
      %v106 = vmul.f32 %v105, %v105
      %vm107 = vcmask 261120
      %v108 = vsel %vm107, %v106, 0.0
      %109 = vadd.xlane.f32.xlu0 %v108
      %v110 = vpop.xlane.xlu0 %109
      %v111 = vadd.f32 %v110, 1e-24
      %v112 = vrsqrt.pop %v111
      %v113 = vmul.f32 %v112, %v111
      %v114 = vmul.f32 %v113, %v112
      %v115 = vmul.f32 0.5, %v114
      %v116 = vsub.f32 1.5, %v115
      %v117 = vmul.f32 %v112, %v116
      %vm118 = vweird.f32 %v111
      %vm119 = vweird.f32 %v112
      %vm120 = vmor %vm118, %vm119
      %v121 = vsel %vm120, %v112, %v117
      %v122 = vmul.f32 %v105, %v121
      %v123 = vpack.c.bf16 %v122, %v122
      %vm124 = vcmask 257024
      %125 = vst.msk [vmem:[#allocation2] sm:$0xf] %vm124, %v123
    $region61: #{tpu_custom_call.1} parent=1 // pred_fallthru
      _
    %v126 = vld [vmem:[%s1] sm:$0xff]
    %v127 = vmul.f32 %v126, %v126
    %vm128 = vcmask 261120
    %v129 = vsel %vm128, %v127, 0.0
    %130 = vadd.xlane.f32.xlu0 %v129
    %v131 = vpop.xlane.xlu0 %130
    %v132 = vadd.f32 %v131, 1e-24
    %v133 = vrsqrt.pop %v132
    %v134 = vmul.f32 %v133, %v132
    %v135 = vmul.f32 %v134, %v133
    %v136 = vmul.f32 0.5, %v135
    %v137 = vsub.f32 1.5, %v136
    %v138 = vmul.f32 %v133, %v137
    %vm139 = vweird.f32 %v132
    %vm140 = vweird.f32 %v133
    %vm141 = vmor %vm139, %vm140
    %v142 = vsel %vm141, %v133, %v138
    %v143 = vmul.f32 %v126, %v142
    %v144 = vpack.c.bf16 %v143, %v143
    %v145 = vld [vmem:[#allocation2] sm:$0xf]
    %v147 = vsel %vm128, %v145, 0
    %v150 = vsel %vm128, %v144, 0
    %152 = vmatpush.bf16.xpose.msra.mxu0 0
    %153 = vmatpush.bf16.xpose.msra.mxu0 0
    %154 = vmatpush.bf16.xpose.msra.mxu0 0
    %155 = vmatpush.bf16.xpose.msra.mxu0 0
    %156 = vmatpush.bf16.xpose.msra.mxu0 0
    %157 = vmatpush.bf16.xpose.msra.mxu0 0
    %158 = vmatpush.bf16.xpose.msra.mxu0 0
    %159 = vmatpush.bf16.xpose.msra.mxu0 %v150
    %160 = vmatmul.bf16.gmra.mxu0 %v147
    %v161 = vpop.f32.mrf.mxu0
    %v162 = vadd.f32 0.0, %v161
    %v163 = vpop.f32.mrf.mxu0
    %164 = vdwg.mxu0
    %v165 = vmul.f32 %v162, 14.285714
    %v166 = vlaneseq
    %v167 = vshrl.u32 %v166, 7
    %s168 = smul.u32 0, 8
    %v169 = vstv %s168
    %v170 = vadd.s32 %v167, %v169
    %v171 = vlaneseq
    %v172 = vand.u32 %v171, 127
    %s173 = smul.u32 0, 8
    %v174 = vstv %s173
    %v175 = vadd.s32 %v172, %v174
    %v176 = vld [vmem:[%s2] sm:$0xff]
    %v177 = vld [vmem:[%s3] sm:$0x1]
    %178 = vset.pattern.permute.xlu0 0
    %179 = vperm.xlu0 %178, %v176
    %v180 = vpop.permute.xlu0 %179
    %v181 = vperm.slane %v177, 0
    %vm182 = vcmp.eq.s32.totalorder %v180, %v181
    %vm183 = vcmp.ne.s32.totalorder %v170, %v175
    %vm184 = vmand %vm182, %vm183
    %v185 = vsel %vm184, 1.0, 0.0
    %v186 = vld [vmem:[#allocation3] sm:$0xff]
    %vm187 = vcmask 64512
    %v188 = vsel %vm187, %v165, -inf
    %189 = vmax.xlane.f32.xlu0 %v188
    %v190 = vpop.xlane.xlu0 %189
    %v191 = vmax.f32 %v186, %v190
    %v192 = vld [vmem:[#allocation4] sm:$0xff]
    %v193 = vsub.f32 %v186, %v191
    %v194 = vmul.f32 %v193, 1.442695
    %v195 = vpow.pop %v194
    %v196 = vmul.f32 %v192, %v195
    %198 = vset.pattern.permute.xlu0 0
    %199 = vperm.xlu0 %198, %v191
    %v200 = vpop.permute.xlu0 %199
    %v202 = vsub.f32 %v165, %v200
    %v203 = vmul.f32 %v202, 1.442695
    %v204 = vpow.pop %v203
    %v205 = vsel %vm187, %v204, 0.0
    %206 = vadd.xlane.f32.xlu0 %v205
    %v207 = vpop.xlane.xlu0 %206
    %v208 = vadd.f32 %v196, %v207
    %vm209 = vcmask 7168
    %210 = vst.msk [vmem:[#allocation4] sm:$0xff] %vm209, %v208
    %v211 = vld [vmem:[#allocation5] sm:$0xff]
    %v212 = vmul.f32 %v185, %v165
    %v213 = vsel %vm187, %v212, 0.0
    %214 = vadd.xlane.f32.xlu0 %v213
    %v215 = vpop.xlane.xlu0 %214
    %v216 = vadd.f32 %v211, %v215
    %217 = vst.msk [vmem:[#allocation5] sm:$0xff] %vm209, %v216
    %v218 = vld [vmem:[#allocation6] sm:$0xff]
    %v219 = vsel %vm187, %v185, 0.0
    %220 = vadd.xlane.f32.xlu0 %v219
    %v221 = vpop.xlane.xlu0 %220
    %v222 = vadd.f32 %v218, %v221
    %223 = vst.msk [vmem:[#allocation6] sm:$0xff] %vm209, %v222
    %224 = vst.msk [vmem:[#allocation3] sm:$0xff] %vm209, %v191
    // Predicated region
    $region62: #{tpu_custom_call.1} parent=1 // pred_check
      %p225 = pneg %p90
    $region63: #{tpu_custom_call.1} parent=1 // pred_check_branch
      %227 = sbr.rel (%p225) target = $region65
    $region64: #{tpu_custom_call.1} parent=1 // pred_region
      %v228 = vld [vmem:[#allocation4] sm:$0xff]
      %v229 = vadd.f32 %v228, 1e-08
      %v230 = vlog2.pop %v229
      %v231 = vmul.f32 %v230, 0.6931472
      %v232 = vld [vmem:[#allocation6] sm:$0xff]
      %v233 = vld [vmem:[#allocation5] sm:$0xff]
      %v234 = vld [vmem:[#allocation3] sm:$0xff]
      %v235 = vadd.f32 %v234, %v231
      %v236 = vmul.f32 %v232, %v235
      %v237 = vsub.f32 %v233, %v236
      %v238 = vmax.f32 %v232, 1.0
      %v239 = vrcp.pop %v238
      %v240 = vmul.f32 %v238, %v239
      %v241 = vsub.f32 1.0, %v240
      %v242 = vmul.f32 %v239, %v241
      %v243 = vadd.f32 %v239, %v242
      %vm244 = vweird.f32 %v238
      %vm245 = vweird.f32 %v239
      %vm246 = vmor %vm244, %vm245
      %v247 = vsel %vm246, %v239, %v243
      %v248 = vand.u32 2147483647, %v238
      %vm249 = vcmp.eq.f32.partialorder %v248, 8.507059e+37
      %v250 = vand.u32 %v238, 2147483648
      %v251 = vor.u32 1.1754944e-38, %v250
      %v252 = vsel %vm249, %v251, %v247
      %v253 = vmul.f32 %v237, %v252
      %v254 = vld [vmem:[#allocation7] sm:$0x1]
      %v255 = vsel %vm209, %v253, 0.0
      %v256 = vrot.slane %v255, 4
      %v257 = vadd.f32 %v255, %v256
      %v258 = vrot.slane %v257, 2
      %v259 = vadd.f32 %v257, %v258
      %v260 = vrot.slane %v259, 1
      %v261 = vadd.f32 %v259, %v260
      %v262 = vadd.f32 %v254, %v261
      %vm263 = vcmask 0
      %264 = vst.msk [vmem:[#allocation7] sm:$0x1] %vm263, %v262
    $region65: #{tpu_custom_call.1} parent=1 // pred_fallthru
      _
    // Predicated region
    $region66: #{tpu_custom_call.1} parent=1 // pred_check
      _
    $region67: #{tpu_custom_call.1} parent=1 // pred_check_branch
      %266 = sbr.rel (%p91) target = $region69
    $region68: #{tpu_custom_call.1} parent=1 // pred_region
      %v267 = vld [vmem:[#allocation7] sm:$0x1]
      %v268 = vmul.f32 %v267, -0.0125
      %v269 = vld [vmem:[#allocation8] sm:$0xff]
      %v270 = vld [vmem:[#allocation11] sm:$0xff]
      %vm271 = vcmp.gt.f32.partialorder %v270, 0.0
      %v272 = vmax.f32 %v270, 1e-30
      %v273 = vlog2.pop %v272
      %v274 = vmul.f32 %v273, 0.6931472
      %v275 = vmul.f32 %v270, %v274
      %v276 = vsel %vm271, %v275, 0.0
      %v277 = vadd.f32 %v269, 1e-10
      %v278 = vlog2.pop %v277
      %v279 = vmul.f32 %v278, 0.6931472
      %v280 = vmul.f32 %v270, %v279
      %v281 = vsub.f32 %v276, %v280
      %vm282 = vcmask 130048
      %v283 = vsel %vm282, %v281, 0.0
      %284 = vadd.xlane.f32.xlu0 %v283
      %v285 = vpop.xlane.xlu0 %284
      %v286 = vld [vmem:[%s6] sm:$0xff]
      %v287 = vmul.f32 %v285, %v286
      %v288 = vsel %vm209, %v287, 0.0
      %v289 = vrot.slane %v288, 4
      %v290 = vadd.f32 %v288, %v289
      %v291 = vrot.slane %v290, 2
      %v292 = vadd.f32 %v290, %v291
      %v293 = vrot.slane %v292, 1
      %v294 = vadd.f32 %v292, %v293
      %v295 = vmul.f32 %v294, 0.125
      %v296 = vld [vmem:[#allocation14] sm:$0xff]
      %v297 = vld [vmem:[#allocation13] sm:$0xff]
      %v298 = vsel %vm282, %v297, -inf
      %299 = vmax.xlane.f32.xlu0 %v298
      %v300 = vpop.xlane.xlu0 %299
      %v301 = vsub.f32 %v297, %v300
      %v302 = vmul.f32 %v301, 1.442695
      %v303 = vpow.pop %v302
      %v304 = vsel %vm282, %v303, 0.0
      %305 = vadd.xlane.f32.xlu0 %v304
      %v306 = vpop.xlane.xlu0 %305
      %v307 = vlog2.pop %v306
      %v308 = vmul.f32 %v307, 0.6931472
      %v309 = vsub.f32 %v301, %v308
      %v310 = vsel %vm282, %v296, 0.0
      %311 = vadd.xlane.f32.xlu0 %v310
      %v312 = vpop.xlane.xlu0 %311
      %v313 = vmax.f32 %v312, 1e-08
      %v314 = vrcp.pop %v313
      %v315 = vmul.f32 %v313, %v314
      %v316 = vsub.f32 1.0, %v315
      %v317 = vmul.f32 %v314, %v316
      %v318 = vadd.f32 %v314, %v317
      %vm319 = vweird.f32 %v313
      %vm320 = vweird.f32 %v314
      %vm321 = vmor %vm319, %vm320
      %v322 = vsel %vm321, %v314, %v318
      %v323 = vand.u32 2147483647, %v313
      %vm324 = vcmp.eq.f32.partialorder %v323, 8.507059e+37
      %v325 = vand.u32 %v313, 2147483648
      %v326 = vor.u32 1.1754944e-38, %v325
      %v327 = vsel %vm324, %v326, %v322
      %v328 = vmul.f32 %v296, %v327
      %vm329 = vcmp.gt.f32.partialorder %v328, 0.0
      %v330 = vmax.f32 %v328, 1e-30
      %v331 = vlog2.pop %v330
      %v332 = vmul.f32 %v331, 0.6931472
      %v333 = vmul.f32 %v328, %v332
      %v334 = vsel %vm329, %v333, 0.0
      %v335 = vmul.f32 %v328, %v309
      %v336 = vsub.f32 %v334, %v335
      %v337 = vsel %vm282, %v336, 0.0
      %338 = vadd.xlane.f32.xlu0 %v337
      %v339 = vpop.xlane.xlu0 %338
      %v340 = vrot.slane %v339, 4
      %v341 = vadd.f32 %v339, %v340
      %v342 = vrot.slane %v341, 2
      %v343 = vadd.f32 %v341, %v342
      %v344 = vrot.slane %v343, 1
      %v345 = vadd.f32 %v343, %v344
      %v346 = vmul.f32 %v345, 0.0375
      %vm347 = vcmp.gt.f32.partialorder %v296, 0.0
      %v348 = vsel %vm347, 1, 0
      %v349 = vcvt.s32.f32 %v348
      %vm350 = vcmp.eq.f32.partialorder %v296, 0.0
      %v351 = vsel %vm350, 1, 0
      %v352 = vcvt.s32.f32 %v351
      %v353 = vsel %vm282, %v352, 0.0
      %354 = vadd.xlane.f32.xlu0 %v353
      %v355 = vpop.xlane.xlu0 %354
      %357 = vset.pattern.permute.xlu0 0
      %358 = vperm.xlu0 %357, %v297
      %v359 = vpop.permute.xlu0 %358
      %v361 = vsub.f32 %v359, %v297
      %v362 = vsub.f32 0.5, %v361
      %v363 = vmax.f32 %v362, 0.0
      %v364 = vmul.f32 %v363, %v352
      %v365 = vsel %vm282, %v364, 0.0
      %366 = vadd.xlane.f32.xlu0 %v365
      %v367 = vpop.xlane.xlu0 %366
      %v368 = vmul.f32 %v349, %v367
      %v369 = vadd.f32 %v368, 0.0
      %v370 = vmul.f32 %v349, %v355
      %v371 = vadd.f32 %v370, 0.0
      %372 = vset.pattern.permute.xlu0 1
      %373 = vperm.xlu0 %372, %v297
      %v374 = vpop.permute.xlu0 %373
      %v376 = vsub.f32 %v374, %v297
      %v377 = vsub.f32 0.5, %v376
      %v378 = vmax.f32 %v377, 0.0
      %v379 = vmul.f32 %v378, %v352
      %v380 = vsel %vm282, %v379, 0.0
      %381 = vadd.xlane.f32.xlu0 %v380
      %v382 = vpop.xlane.xlu0 %381
      %v383 = vmul.f32 %v349, %v382
      %385 = vrot.lane.b32.xlu0 %v383, 127
      %v386 = vpop.permute.xlu0 %385
      %v388 = vadd.f32 %v369, %v386
      %390 = vrot.lane.b32.xlu0 %v370, 127
      %v391 = vpop.permute.xlu0 %390
      %v393 = vadd.f32 %v371, %v391
      %394 = vset.pattern.permute.xlu0 2
      %395 = vperm.xlu0 %394, %v297
      %v396 = vpop.permute.xlu0 %395
      %v398 = vsub.f32 %v396, %v297
      %v399 = vsub.f32 0.5, %v398
      %v400 = vmax.f32 %v399, 0.0
      %v401 = vmul.f32 %v400, %v352
      %v402 = vsel %vm282, %v401, 0.0
      %403 = vadd.xlane.f32.xlu0 %v402
      %v404 = vpop.xlane.xlu0 %403
      %v405 = vmul.f32 %v349, %v404
      %407 = vrot.lane.b32.xlu0 %v405, 126
      %v408 = vpop.permute.xlu0 %407
      %v410 = vadd.f32 %v388, %v408
      %411 = vrot.lane.b32.xlu0 %v370, 126
      %v412 = vpop.permute.xlu0 %411
      %v414 = vadd.f32 %v393, %v412
      %415 = vset.pattern.permute.xlu0 3
      %416 = vperm.xlu0 %415, %v297
      %v417 = vpop.permute.xlu0 %416
      %v419 = vsub.f32 %v417, %v297
      %v420 = vsub.f32 0.5, %v419
      %v421 = vmax.f32 %v420, 0.0
      %v422 = vmul.f32 %v421, %v352
      %v423 = vsel %vm282, %v422, 0.0
      %424 = vadd.xlane.f32.xlu0 %v423
      %v425 = vpop.xlane.xlu0 %424
      %v426 = vmul.f32 %v349, %v425
      %428 = vrot.lane.b32.xlu0 %v426, 125
      %v429 = vpop.permute.xlu0 %428
      %v431 = vadd.f32 %v410, %v429
      %432 = vrot.lane.b32.xlu0 %v370, 125
      %v433 = vpop.permute.xlu0 %432
      %v435 = vadd.f32 %v414, %v433
      %436 = vset.pattern.permute.xlu0 4
      %437 = vperm.xlu0 %436, %v297
      %v438 = vpop.permute.xlu0 %437
      %v440 = vsub.f32 %v438, %v297
      %v441 = vsub.f32 0.5, %v440
      %v442 = vmax.f32 %v441, 0.0
      %v443 = vmul.f32 %v442, %v352
      %v444 = vsel %vm282, %v443, 0.0
      %445 = vadd.xlane.f32.xlu0 %v444
      %v446 = vpop.xlane.xlu0 %445
      %v447 = vmul.f32 %v349, %v446
      %449 = vrot.lane.b32.xlu0 %v447, 124
      %v450 = vpop.permute.xlu0 %449
      %v452 = vadd.f32 %v431, %v450
      %453 = vrot.lane.b32.xlu0 %v370, 124
      %v454 = vpop.permute.xlu0 %453
      %v456 = vadd.f32 %v435, %v454
      %457 = vset.pattern.permute.xlu0 5
      %458 = vperm.xlu0 %457, %v297
      %v459 = vpop.permute.xlu0 %458
      %v461 = vsub.f32 %v459, %v297
      %v462 = vsub.f32 0.5, %v461
      %v463 = vmax.f32 %v462, 0.0
      %v464 = vmul.f32 %v463, %v352
      %v465 = vsel %vm282, %v464, 0.0
      %466 = vadd.xlane.f32.xlu0 %v465
      %v467 = vpop.xlane.xlu0 %466
      %v468 = vmul.f32 %v349, %v467
      %470 = vrot.lane.b32.xlu0 %v468, 123
      %v471 = vpop.permute.xlu0 %470
      %v473 = vadd.f32 %v452, %v471
      %474 = vrot.lane.b32.xlu0 %v370, 123
      %v475 = vpop.permute.xlu0 %474
      %v477 = vadd.f32 %v456, %v475
      %478 = vset.pattern.permute.xlu0 6
      %479 = vperm.xlu0 %478, %v297
      %v480 = vpop.permute.xlu0 %479
      %v482 = vsub.f32 %v480, %v297
      %v483 = vsub.f32 0.5, %v482
      %v484 = vmax.f32 %v483, 0.0
      %v485 = vmul.f32 %v484, %v352
      %v486 = vsel %vm282, %v485, 0.0
      %487 = vadd.xlane.f32.xlu0 %v486
      %v488 = vpop.xlane.xlu0 %487
      %v489 = vmul.f32 %v349, %v488
      %491 = vrot.lane.b32.xlu0 %v489, 122
      %v492 = vpop.permute.xlu0 %491
      %v494 = vadd.f32 %v473, %v492
      %495 = vrot.lane.b32.xlu0 %v370, 122
      %v496 = vpop.permute.xlu0 %495
      %v498 = vadd.f32 %v477, %v496
      %499 = vset.pattern.permute.xlu0 7
      %500 = vperm.xlu0 %499, %v297
      %v501 = vpop.permute.xlu0 %500
      %v503 = vsub.f32 %v501, %v297
      %v504 = vsub.f32 0.5, %v503
      %v505 = vmax.f32 %v504, 0.0
      %v506 = vmul.f32 %v505, %v352
      %v507 = vsel %vm282, %v506, 0.0
      %508 = vadd.xlane.f32.xlu0 %v507
      %v509 = vpop.xlane.xlu0 %508
      %v510 = vmul.f32 %v349, %v509
      %512 = vrot.lane.b32.xlu0 %v510, 121
      %v513 = vpop.permute.xlu0 %512
      %v515 = vadd.f32 %v494, %v513
      %516 = vrot.lane.b32.xlu0 %v370, 121
      %v517 = vpop.permute.xlu0 %516
      %v519 = vadd.f32 %v498, %v517
      %520 = vset.pattern.permute.xlu0 8
      %521 = vperm.xlu0 %520, %v297
      %v522 = vpop.permute.xlu0 %521
      %v524 = vsub.f32 %v522, %v297
      %v525 = vsub.f32 0.5, %v524
      %v526 = vmax.f32 %v525, 0.0
      %v527 = vmul.f32 %v526, %v352
      %v528 = vsel %vm282, %v527, 0.0
      %529 = vadd.xlane.f32.xlu0 %v528
      %v530 = vpop.xlane.xlu0 %529
      %v531 = vmul.f32 %v349, %v530
      %533 = vrot.lane.b32.xlu0 %v531, 120
      %v534 = vpop.permute.xlu0 %533
      %v536 = vadd.f32 %v515, %v534
      %537 = vrot.lane.b32.xlu0 %v370, 120
      %v538 = vpop.permute.xlu0 %537
      %v540 = vadd.f32 %v519, %v538
      %541 = vset.pattern.permute.xlu0 9
      %542 = vperm.xlu0 %541, %v297
      %v543 = vpop.permute.xlu0 %542
      %v545 = vsub.f32 %v543, %v297
      %v546 = vsub.f32 0.5, %v545
      %v547 = vmax.f32 %v546, 0.0
      %v548 = vmul.f32 %v547, %v352
      %v549 = vsel %vm282, %v548, 0.0
      %550 = vadd.xlane.f32.xlu0 %v549
      %v551 = vpop.xlane.xlu0 %550
      %v552 = vmul.f32 %v349, %v551
      %554 = vrot.lane.b32.xlu0 %v552, 119
      %v555 = vpop.permute.xlu0 %554
      %v557 = vadd.f32 %v536, %v555
      %558 = vrot.lane.b32.xlu0 %v370, 119
      %v559 = vpop.permute.xlu0 %558
      %v561 = vadd.f32 %v540, %v559
      %562 = vset.pattern.permute.xlu0 10
      %563 = vperm.xlu0 %562, %v297
      %v564 = vpop.permute.xlu0 %563
      %v566 = vsub.f32 %v564, %v297
      %v567 = vsub.f32 0.5, %v566
      %v568 = vmax.f32 %v567, 0.0
      %v569 = vmul.f32 %v568, %v352
      %v570 = vsel %vm282, %v569, 0.0
      %571 = vadd.xlane.f32.xlu0 %v570
      %v572 = vpop.xlane.xlu0 %571
      %v573 = vmul.f32 %v349, %v572
      %575 = vrot.lane.b32.xlu0 %v573, 118
      %v576 = vpop.permute.xlu0 %575
      %v578 = vadd.f32 %v557, %v576
      %579 = vrot.lane.b32.xlu0 %v370, 118
      %v580 = vpop.permute.xlu0 %579
      %v582 = vadd.f32 %v561, %v580
      %583 = vset.pattern.permute.xlu0 11
      %584 = vperm.xlu0 %583, %v297
      %v585 = vpop.permute.xlu0 %584
      %v587 = vsub.f32 %v585, %v297
      %v588 = vsub.f32 0.5, %v587
      %v589 = vmax.f32 %v588, 0.0
      %v590 = vmul.f32 %v589, %v352
      %v591 = vsel %vm282, %v590, 0.0
      %592 = vadd.xlane.f32.xlu0 %v591
      %v593 = vpop.xlane.xlu0 %592
      %v594 = vmul.f32 %v349, %v593
      %596 = vrot.lane.b32.xlu0 %v594, 117
      %v597 = vpop.permute.xlu0 %596
      %v599 = vadd.f32 %v578, %v597
      %600 = vrot.lane.b32.xlu0 %v370, 117
      %v601 = vpop.permute.xlu0 %600
      %v603 = vadd.f32 %v582, %v601
      %604 = vset.pattern.permute.xlu0 12
      %605 = vperm.xlu0 %604, %v297
      %v606 = vpop.permute.xlu0 %605
      %v608 = vsub.f32 %v606, %v297
      %v609 = vsub.f32 0.5, %v608
      %v610 = vmax.f32 %v609, 0.0
      %v611 = vmul.f32 %v610, %v352
      %v612 = vsel %vm282, %v611, 0.0
      %613 = vadd.xlane.f32.xlu0 %v612
      %v614 = vpop.xlane.xlu0 %613
      %v615 = vmul.f32 %v349, %v614
      %617 = vrot.lane.b32.xlu0 %v615, 116
      %v618 = vpop.permute.xlu0 %617
      %v620 = vadd.f32 %v599, %v618
      %621 = vrot.lane.b32.xlu0 %v370, 116
      %v622 = vpop.permute.xlu0 %621
      %v624 = vadd.f32 %v603, %v622
      %625 = vset.pattern.permute.xlu0 13
      %626 = vperm.xlu0 %625, %v297
      %v627 = vpop.permute.xlu0 %626
      %v629 = vsub.f32 %v627, %v297
      %v630 = vsub.f32 0.5, %v629
      %v631 = vmax.f32 %v630, 0.0
      %v632 = vmul.f32 %v631, %v352
      %v633 = vsel %vm282, %v632, 0.0
      %634 = vadd.xlane.f32.xlu0 %v633
      %v635 = vpop.xlane.xlu0 %634
      %v636 = vmul.f32 %v349, %v635
      %638 = vrot.lane.b32.xlu0 %v636, 115
      %v639 = vpop.permute.xlu0 %638
      %v641 = vadd.f32 %v620, %v639
      %642 = vrot.lane.b32.xlu0 %v370, 115
      %v643 = vpop.permute.xlu0 %642
      %v645 = vadd.f32 %v624, %v643
      %646 = vset.pattern.permute.xlu0 14
      %647 = vperm.xlu0 %646, %v297
      %v648 = vpop.permute.xlu0 %647
      %v650 = vsub.f32 %v648, %v297
      %v651 = vsub.f32 0.5, %v650
      %v652 = vmax.f32 %v651, 0.0
      %v653 = vmul.f32 %v652, %v352
      %v654 = vsel %vm282, %v653, 0.0
      %655 = vadd.xlane.f32.xlu0 %v654
      %v656 = vpop.xlane.xlu0 %655
      %v657 = vmul.f32 %v349, %v656
      %659 = vrot.lane.b32.xlu0 %v657, 114
      %v660 = vpop.permute.xlu0 %659
      %v662 = vadd.f32 %v641, %v660
      %663 = vrot.lane.b32.xlu0 %v370, 114
      %v664 = vpop.permute.xlu0 %663
      %v666 = vadd.f32 %v645, %v664
      %667 = vset.pattern.permute.xlu0 15
      %668 = vperm.xlu0 %667, %v297
      %v669 = vpop.permute.xlu0 %668
      %v671 = vsub.f32 %v669, %v297
      %v672 = vsub.f32 0.5, %v671
      %v673 = vmax.f32 %v672, 0.0
      %v674 = vmul.f32 %v673, %v352
      %v675 = vsel %vm282, %v674, 0.0
      %676 = vadd.xlane.f32.xlu0 %v675
      %v677 = vpop.xlane.xlu0 %676
      %v678 = vmul.f32 %v349, %v677
      %680 = vrot.lane.b32.xlu0 %v678, 113
      %v681 = vpop.permute.xlu0 %680
      %v683 = vadd.f32 %v662, %v681
      %684 = vrot.lane.b32.xlu0 %v370, 113
      %v685 = vpop.permute.xlu0 %684
      %v687 = vadd.f32 %v666, %v685
      %v688 = vsel %vm209, %v683, 0.0
      %v689 = vrot.slane %v688, 4
      %v690 = vadd.f32 %v688, %v689
      %v691 = vrot.slane %v690, 2
      %v692 = vadd.f32 %v690, %v691
      %v693 = vrot.slane %v692, 1
      %v694 = vadd.f32 %v692, %v693
      %v695 = vsel %vm209, %v687, 0.0
      %v696 = vrot.slane %v695, 4
      %v697 = vadd.f32 %v695, %v696
      %v698 = vrot.slane %v697, 2
      %v699 = vadd.f32 %v697, %v698
      %v700 = vrot.slane %v699, 1
      %v701 = vadd.f32 %v699, %v700
      %vm702 = vcmp.gt.f32.partialorder %v701, 0.0
      %v703 = vmax.f32 %v701, 1.0
      %v704 = vrcp.pop %v703
      %v705 = vmul.f32 %v703, %v704
      %v706 = vsub.f32 1.0, %v705
      %v707 = vmul.f32 %v704, %v706
      %v708 = vadd.f32 %v704, %v707
      %vm709 = vweird.f32 %v703
      %vm710 = vweird.f32 %v704
      %vm711 = vmor %vm709, %vm710
      %v712 = vsel %vm711, %v704, %v708
      %v713 = vand.u32 2147483647, %v703
      %vm714 = vcmp.eq.f32.partialorder %v713, 8.507059e+37
      %v715 = vand.u32 %v703, 2147483648
      %v716 = vor.u32 1.1754944e-38, %v715
      %v717 = vsel %vm714, %v716, %v712
      %v718 = vmul.f32 %v694, %v717
      %v719 = vsel %vm702, %v718, 0.0
      %v720 = vmul.f32 %v719, 0.1
      %v721 = vadd.f32 %v295, %v268
      %v722 = vadd.f32 %v721, %v346
      %v723 = vadd.f32 %v722, %v720
      %vm724 = vcmp.eq.s32.totalorder %v172, 0
      %726 = vset.pattern.permute.xlu0 0
      %727 = vperm.xlu0 %726, %v295
      %v728 = vpop.permute.xlu0 %727
      %v730 = vsel %vm724, %v728, 0.0
      %vm731 = vcmp.eq.s32.totalorder %v172, 1
      %733 = vset.pattern.permute.xlu0 0
      %734 = vperm.xlu0 %733, %v268
      %v735 = vpop.permute.xlu0 %734
      %v737 = vperm.slane %v735, 0
      %v738 = vsel %vm731, %v737, 0.0
      %v739 = vadd.f32 %v730, %v738
      %vm740 = vcmp.eq.s32.totalorder %v172, 2
      %v741 = vsel %vm740, %v346, 0.0
      %v742 = vadd.f32 %v739, %v741
      %vm743 = vcmp.eq.s32.totalorder %v172, 3
      %745 = vset.pattern.permute.xlu0 0
      %746 = vperm.xlu0 %745, %v720
      %v747 = vpop.permute.xlu0 %746
      %v749 = vsel %vm743, %v747, 0.0
      %v750 = vadd.f32 %v742, %v749
      %vm751 = vcmp.eq.s32.totalorder %v172, 4
      %753 = vset.pattern.permute.xlu0 0
      %754 = vperm.xlu0 %753, %v723
      %v755 = vpop.permute.xlu0 %754
      %v757 = vsel %vm751, %v755, 0.0
      %v758 = vadd.f32 %v750, %v757
      %759 = vst [vmem:[#allocation16] sm:$0x1] %v758
    $region69: #{tpu_custom_call.1} parent=1 // pred_fallthru
      _
    // Predicated region
    $region70: #{tpu_custom_call.1} parent=1 // pred_check
      _
    $region71: #{tpu_custom_call.1} parent=1 // pred_check_branch
      %761 = sbr.rel (0) target = $region73
    $region72: #{tpu_custom_call.1} parent=1 // pred_region
      %763 = vsyncadd [#allocation10], 0
      %s765 = sshll.u32 [#allocation16], 4
      %s766 = int_to_ptr.vmem [resolvable:$true] %s765
      %s767 = sshll.u32 %s9, 4
      %s768 = int_to_ptr.hbm [resolvable:$true] %s767
      %770 = dma.vmem_to_hbm [thread:$0]  %s766, 16, %s768, [#allocation10]
    $region73: #{tpu_custom_call.1} parent=1 // pred_fallthru
      _
    // Predicated region
    $region74: #{tpu_custom_call.1} parent=1 // pred_check
      _
    $region75: #{tpu_custom_call.1} parent=1 // pred_check_branch
      %772 = sbr.rel (0) target = $region77
    $region76: #{tpu_custom_call.1} parent=1 // pred_region
      %774 = dma.done [#allocation10], 16
    $region77: #{tpu_custom_call.1} parent=1 // pred_fallthru
      _
    %775 = vsyncpa [#allocation9], 1
    %776 = vsyncpa [#allocation12], 1
    %777 = vsyncpa [#allocation15], 1
    %778 = vsyncpa [#allocation10], 1

</llo_original>
